<compile_context>
chip_gen: v6e
topology: v6e:2x2x1
jax: 0.10.0
libtpu: 0.0.40
codegen_flags: <defaults>
</compile_context>

<pallas_src>
import functools

import jax
import jax.numpy as jnp
from jax.experimental import pallas as pl
from jax.experimental.pallas import tpu as pltpu

# ----------------------------- small synthetic config -----------------------
B = 2            # batch
S = 8            # sequence length
H = 128          # hidden size (stands in for 768)
N_HEADS = 4
D_HEAD = H // N_HEADS
FFN = 256        # intermediate size (stands in for 3072)
N_BERT_LAYERS = 2
N_AGG_LAYERS = 2     # cfg.MODEL.LANGUAGE_BACKBONE.N_LAYERS
VOCAB = 64
MAX_POS = 16
LN_EPS = 1e-12
NHS = N_HEADS * S    # widened (all-heads) key axis
BS = B * S           # tokens per kernel block


# ----------------------------- in-kernel helpers -----------------------------
def _ln(x, g, b):
    """LayerNorm over the last axis (f32 math)."""
    mean = jnp.mean(x, axis=-1, keepdims=True)
    var = jnp.mean(jnp.square(x - mean), axis=-1, keepdims=True)
    return (x - mean) * jax.lax.rsqrt(var + LN_EPS) * g + b


# ----------------------------- fused encoder kernel --------------------------
def _encoder_kernel(bias_ref, mrow_ref, hmask_ref, sel_ref, invd_ref,
                    word_ref, pt_ref, eg_ref, eb_ref,
                    wqkv_ref, bqkv_ref, wo_ref, bo_ref, l1g_ref, l1b_ref,
                    wi_ref, bi_ref, wf_ref, bf_ref, l2g_ref, l2b_ref,
                    hidden_ref, embedded_ref, agg_ref,
                    x_scr, acc_scr,
                    *, n_layers, n_agg, n_heads, d_head, bsz, seq,
                    scale, inv_feat_scale):
    l = pl.program_id(0)
    hdim = n_heads * d_head
    n_tok = bsz * seq
    nhs = n_heads * seq

    # ---- layer 0: fused embeddings (word + pos + token_type) + embedding LN ----
    @pl.when(l == 0)
    def _():
        emb0 = word_ref[...] + pt_ref[...]                         # (BS, H) f32
        x_scr[...] = _ln(emb0, eg_ref[...], eb_ref[...])
        acc_scr[...] = jnp.zeros_like(acc_scr)

    x = x_scr[...]                                                  # (BS, H) f32
    hm = hmask_ref[...]                                             # (NHS, H) f32

    # ---- fused QKV projection over all B*S tokens (bf16 MXU, f32 acc) ----
    qkv = jnp.dot(x.astype(jnp.bfloat16), wqkv_ref[0],
                  preferred_element_type=jnp.float32) + bqkv_ref[0]  # (BS, 3H)

    # 128-lane-aligned slices; leading-dim-only reshapes (last dim untouched).
    q3 = (qkv[:, :hdim] * scale).reshape(bsz, seq, hdim).astype(jnp.bfloat16)
    k3 = qkv[:, hdim:2 * hdim].reshape(bsz, seq, hdim)
    v3 = qkv[:, 2 * hdim:].reshape(bsz, seq, hdim)

    # ---- all-heads attention via block-diagonal widened K/V ----
    # Row j of k_t/v_t holds key (j % seq) restricted to head (j // seq)'s
    # feature columns, so ONE full-contraction (K=H) matmul yields every head's
    # scores and the context comes out lane-dense - no per-head slices/concat.
    # TODO(synk): at real scale (S >= 128) switch to a heads-batched einsum to
    # avoid the n_heads-fold redundant MXU flops of the widened form.
    k_t = (jnp.concatenate([k3] * n_heads, axis=1) * hm).astype(jnp.bfloat16)
    v_t = (jnp.concatenate([v3] * n_heads, axis=1) * hm).astype(jnp.bfloat16)

    s = jnp.einsum('bqh,bjh->bqj', q3, k_t,
                   preferred_element_type=jnp.float32)              # (B, S, NHS)
    s = s + bias_ref[...]                                           # key-pad bias
    # Per-row (all heads) max subtraction: per-head softmax is invariant to a
    # per-row constant, so this is exact.
    m = jnp.max(s, axis=-1, keepdims=True)
    e = jnp.exp(s - m)                                              # unnormalized probs

    # Per-head denominator, broadcast straight to that head's feature columns.
    den_feat = jnp.dot(e.reshape(n_tok, nhs), hm,
                       preferred_element_type=jnp.float32)          # (BS, H)

    ctx = jnp.einsum('bqj,bjh->bqh', e.astype(jnp.bfloat16), v_t,
                     preferred_element_type=jnp.float32)            # (B, S, H)
    ctx = ctx.reshape(n_tok, hdim) / den_feat                       # exact divide

    # ---- attention output projection + residual + LayerNorm (post-LN) ----
    attn = jnp.dot(ctx.astype(jnp.bfloat16), wo_ref[0],
                   preferred_element_type=jnp.float32) + bo_ref[0] + x
    y = _ln(attn, l1g_ref[0], l1b_ref[0])

    # ---- FFN (intermediate never leaves VMEM) + residual + LayerNorm ----
    # TODO(synk): HF BERT uses erf-based gelu; tanh approximation kept for a
    # guaranteed Mosaic lowering (numerical difference ~1e-3).
    inter = jnp.dot(y.astype(jnp.bfloat16), wi_ref[0],
                    preferred_element_type=jnp.float32) + bi_ref[0]
    inter = jax.nn.gelu(inter, approximate=True)
    ffn = jnp.dot(inter.astype(jnp.bfloat16), wf_ref[0],
                  preferred_element_type=jnp.float32) + bf_ref[0] + y
    out = _ln(ffn, l2g_ref[0], l2b_ref[0])

    x_scr[...] = out                                                # carry residual stream

    # ---- running sum of the last n_agg layer outputs ----
    @pl.when(l >= n_layers - n_agg)
    def _():
        acc_scr[...] = acc_scr[...] + out

    # ---- final layer: emit hidden / embedded / aggregate ----
    @pl.when(l == n_layers - 1)
    def _():
        hidden_ref[...] = out
        # features = mean(last n_agg hidden states) / num_layers  (the GLIP
        # reference divides by num_layers twice: once inside mean(1), once
        # explicitly afterwards).
        feats = acc_scr[...] * inv_feat_scale
        emb = feats * mrow_ref[...]                                 # zero padded tokens
        embedded_ref[...] = emb
        # aggregate = embedded.sum(seq) / mask.sum(seq); denominator clamped to
        # >=1 on the host (the reference would NaN on an all-padded row).
        agg_ref[...] = jnp.dot(sel_ref[...], emb,
                               preferred_element_type=jnp.float32) * invd_ref[...]


# ----------------------------- kernel wrapper ---------------------------------
def encoder_call(bias_full, mask_rows, head_mask, sel, inv_denom, word,
                 pos_type, params):
    p = params
    const2 = lambda l: (0, 0)
    const3 = lambda l: (0, 0, 0)
    wmap = lambda l: (l, 0, 0)

    kernel = functools.partial(
        _encoder_kernel, n_layers=N_BERT_LAYERS, n_agg=N_AGG_LAYERS,
        n_heads=N_HEADS, d_head=D_HEAD, bsz=B, seq=S,
        scale=1.0 / (D_HEAD ** 0.5),
        inv_feat_scale=1.0 / float(N_AGG_LAYERS * N_AGG_LAYERS))

    return pl.pallas_call(
        kernel,
        grid=(N_BERT_LAYERS,),
        out_shape=(jax.ShapeDtypeStruct((BS, H), jnp.float32),   # hidden (last layer)
                   jax.ShapeDtypeStruct((BS, H), jnp.float32),   # embedded
                   jax.ShapeDtypeStruct((B, H), jnp.float32)),   # aggregate
        in_specs=[
            pl.BlockSpec((B, S, NHS), const3),     # additive key-pad bias
            pl.BlockSpec((BS, 1), const2),         # per-token mask column
            pl.BlockSpec((NHS, H), const2),        # head block-diagonal mask
            pl.BlockSpec((B, BS), const2),         # batch selector for seq-sum
            pl.BlockSpec((B, 1), const2),          # 1 / clamp(mask.sum, 1)
            pl.BlockSpec((BS, H), const2),         # gathered word embeddings
            pl.BlockSpec((BS, H), const2),         # position + token-type embeddings
            pl.BlockSpec((1, H), const2),          # embedding LN gamma
            pl.BlockSpec((1, H), const2),          # embedding LN beta
            pl.BlockSpec((1, H, 3 * H), wmap),     # wqkv (bf16, stacked over layers)
            pl.BlockSpec((1, 1, 3 * H), wmap),     # bqkv
            pl.BlockSpec((1, H, H), wmap),         # wo (bf16)
            pl.BlockSpec((1, 1, H), wmap),         # bo
            pl.BlockSpec((1, 1, H), wmap),         # ln1 gamma
            pl.BlockSpec((1, 1, H), wmap),         # ln1 beta
            pl.BlockSpec((1, H, FFN), wmap),       # wi (bf16)
            pl.BlockSpec((1, 1, FFN), wmap),       # bi
            pl.BlockSpec((1, FFN, H), wmap),       # wf (bf16)
            pl.BlockSpec((1, 1, H), wmap),         # bf
            pl.BlockSpec((1, 1, H), wmap),         # ln2 gamma
            pl.BlockSpec((1, 1, H), wmap),         # ln2 beta
        ],
        out_specs=(pl.BlockSpec((BS, H), const2),
                   pl.BlockSpec((BS, H), const2),
                   pl.BlockSpec((B, H), const2)),
        scratch_shapes=[pltpu.VMEM((BS, H), jnp.float32),   # residual stream
                        pltpu.VMEM((BS, H), jnp.float32)],  # last-N-layer sum
        compiler_params=pltpu.CompilerParams(
            dimension_semantics=("arbitrary",),
            # Toy shapes fit easily; at real scale (~14 MB bf16 weights/layer,
            # double-buffered) this limit must be raised / the FFN K-tiled.
            vmem_limit_bytes=32 * 1024 * 1024),
    )(bias_full, mask_rows, head_mask, sel, inv_denom, word, pos_type,
      p["emb_ln_g"], p["emb_ln_b"],
      p["wqkv"], p["bqkv"], p["wo"], p["bo"], p["ln1_g"], p["ln1_b"],
      p["wi"], p["bi"], p["wf"], p["bf"], p["ln2_g"], p["ln2_b"])


# ----------------------------- forward pass -----------------------------------
def bert_encoder_forward(input_ids, attention_mask, params):
    # USE_DOT_PRODUCT_TOKEN_LOSS=True branch (no data-dependent max_len slicing).
    maskf = attention_mask.astype(jnp.float32)                       # (B, S)

    # Tiny host-side constants, loaded once into VMEM (constant index_map).
    neg = (1.0 - maskf) * (-10000.0)                                 # HF extended mask
    bias_full = jnp.broadcast_to(
        jnp.tile(neg[:, None, :], (1, 1, N_HEADS)), (B, S, NHS))
    mask_rows = maskf.reshape(BS, 1)
    inv_denom = 1.0 / jnp.maximum(jnp.sum(maskf, axis=-1, keepdims=True), 1.0)
    feat_head = jnp.arange(H, dtype=jnp.int32) // D_HEAD
    row_head = jnp.arange(NHS, dtype=jnp.int32) // S
    head_mask = (row_head[:, None] == feat_head[None, :]).astype(jnp.float32)
    sel = (jnp.arange(B, dtype=jnp.int32)[:, None]
           == (jnp.arange(BS, dtype=jnp.int32) // S)[None, :]).astype(jnp.float32)
    pos_type = jnp.tile(params["pos_slice"], (B, 1)) + params["type_vec"]

    # TODO(synk): the vocabulary row gather stays in XLA; fusing it needs a
    # PrefetchScalarGridSpec / manual DMA gather on word_emb.
    word = jnp.take(params["word_emb"], input_ids.reshape(-1), axis=0)  # (BS, H)

    hidden, embedded, aggregate = encoder_call(
        bias_full, mask_rows, head_mask, sel, inv_denom, word, pos_type, params)

    # use_upt / use_maple / lang_adap_mlp branches disabled (default config).
    return {
        "aggregate": aggregate,                    # (B, H)
        "embedded": embedded.reshape(B, S, H),     # (B, S, H)
        "masks": attention_mask,                   # (B, S)
        "hidden": hidden.reshape(B, S, H),         # (B, S, H)
    }


# ----------------------------- deterministic parameter init ------------------
def init_params(key):
    def nrm(k, shape, dtype=jnp.float32):
        return (jax.random.normal(k, shape, jnp.float32) * 0.02).astype(dtype)

    keys = jax.random.split(key, 3 + N_BERT_LAYERS)
    wqkv, wo, wi, wf = [], [], [], []
    for l in range(N_BERT_LAYERS):
        ks = jax.random.split(keys[3 + l], 6)
        wq, wk, wv = nrm(ks[0], (H, H)), nrm(ks[1], (H, H)), nrm(ks[2], (H, H))
        wqkv.append(jnp.concatenate([wq, wk, wv], axis=1))
        wo.append(nrm(ks[3], (H, H)))
        wi.append(nrm(ks[4], (H, FFN)))
        wf.append(nrm(ks[5], (FFN, H)))

    L = N_BERT_LAYERS
    return {
        "word_emb": nrm(keys[0], (VOCAB, H)),
        "pos_slice": nrm(keys[1], (MAX_POS, H))[:S],        # positions 0..S-1
        "type_vec": nrm(keys[2], (2, H))[0:1],              # token_type_ids = 0
        "emb_ln_g": jnp.ones((1, H), jnp.float32),
        "emb_ln_b": jnp.zeros((1, H), jnp.float32),
        # Layer weights stacked over the layer axis so one pallas_call streams
        # them with grid index_map (l, 0, 0).  bf16 for MXU operands.
        "wqkv": jnp.stack(wqkv).astype(jnp.bfloat16),       # (L, H, 3H)
        "bqkv": jnp.zeros((L, 1, 3 * H), jnp.float32),
        "wo": jnp.stack(wo).astype(jnp.bfloat16),           # (L, H, H)
        "bo": jnp.zeros((L, 1, H), jnp.float32),
        "ln1_g": jnp.ones((L, 1, H), jnp.float32),
        "ln1_b": jnp.zeros((L, 1, H), jnp.float32),
        "wi": jnp.stack(wi).astype(jnp.bfloat16),           # (L, H, FFN)
        "bi": jnp.zeros((L, 1, FFN), jnp.float32),
        "wf": jnp.stack(wf).astype(jnp.bfloat16),           # (L, FFN, H)
        "bf": jnp.zeros((L, 1, H), jnp.float32),
        "ln2_g": jnp.ones((L, 1, H), jnp.float32),
        "ln2_b": jnp.zeros((L, 1, H), jnp.float32),
    }


if __name__ == "__main__":
    root = jax.random.PRNGKey(0)
    kp, ki = jax.random.split(root, 2)
    params = init_params(kp)

    input_ids = jax.random.randint(ki, (B, S), 1, VOCAB, dtype=jnp.int32)
    attention_mask = jnp.ones((B, S), jnp.int32).at[:, S - 2:].set(0)   # 2 pad tokens

    fwd = jax.jit(lambda ids, m: bert_encoder_forward(ids, m, params))
    ret = fwd(input_ids, attention_mask)
    jax.tree_util.tree_map(jax.block_until_ready, ret)

    assert ret["aggregate"].shape == (B, H)
    assert ret["embedded"].shape == (B, S, H)
    assert ret["hidden"].shape == (B, S, H)
    assert bool(jnp.isfinite(ret["aggregate"]).all())
    assert bool(jnp.isfinite(ret["embedded"]).all())
    assert bool(jnp.isfinite(ret["hidden"]).all())
    print("KERNEL_OK")
</pallas_src>

<mosaic_0001>
module attributes {stable_mosaic.version = 11 : i64} {
  func.func @_encoder_kernel(%arg0: i32, %arg1: memref<2x8x32xf32, #tpu.memory_space<vmem>>, %arg2: memref<16x1xf32, #tpu.memory_space<vmem>>, %arg3: memref<32x128xf32, #tpu.memory_space<vmem>>, %arg4: memref<2x16xf32, #tpu.memory_space<vmem>>, %arg5: memref<2x1xf32, #tpu.memory_space<vmem>>, %arg6: memref<16x128xf32, #tpu.memory_space<vmem>>, %arg7: memref<16x128xf32, #tpu.memory_space<vmem>>, %arg8: memref<1x128xf32, #tpu.memory_space<vmem>>, %arg9: memref<1x128xf32, #tpu.memory_space<vmem>>, %arg10: memref<1x128x384xbf16, #tpu.memory_space<vmem>>, %arg11: memref<1x1x384xf32, #tpu.memory_space<vmem>>, %arg12: memref<1x128x128xbf16, #tpu.memory_space<vmem>>, %arg13: memref<1x1x128xf32, #tpu.memory_space<vmem>>, %arg14: memref<1x1x128xf32, #tpu.memory_space<vmem>>, %arg15: memref<1x1x128xf32, #tpu.memory_space<vmem>>, %arg16: memref<1x128x256xbf16, #tpu.memory_space<vmem>>, %arg17: memref<1x1x256xf32, #tpu.memory_space<vmem>>, %arg18: memref<1x256x128xbf16, #tpu.memory_space<vmem>>, %arg19: memref<1x1x128xf32, #tpu.memory_space<vmem>>, %arg20: memref<1x1x128xf32, #tpu.memory_space<vmem>>, %arg21: memref<1x1x128xf32, #tpu.memory_space<vmem>>, %arg22: memref<16x128xf32, #tpu.memory_space<vmem>>, %arg23: memref<16x128xf32, #tpu.memory_space<vmem>>, %arg24: memref<2x128xf32, #tpu.memory_space<vmem>>, %arg25: memref<16x128xf32, #tpu.memory_space<vmem>>, %arg26: memref<16x128xf32, #tpu.memory_space<vmem>>) attributes {dimension_semantics = [#tpu.dimension_semantics<arbitrary>], iteration_bounds = array<i64: 2>, scalar_prefetch = 0 : i64, scratch_operands = 2 : i64, tpu.core_type = #tpu.core_type<tc>, window_params = [{pipeline_mode = #tpu.pipeline_mode<synchronous>, transform_indices = @transform_0, window_bounds = array<i64: 2, 8, 32>}, {pipeline_mode = #tpu.pipeline_mode<synchronous>, transform_indices = @transform_1, window_bounds = array<i64: 16, 1>}, {pipeline_mode = #tpu.pipeline_mode<synchronous>, transform_indices = @transform_2, window_bounds = array<i64: 32, 128>}, {pipeline_mode = #tpu.pipeline_mode<synchronous>, transform_indices = @transform_3, window_bounds = array<i64: 2, 16>}, {pipeline_mode = #tpu.pipeline_mode<synchronous>, transform_indices = @transform_4, window_bounds = array<i64: 2, 1>}, {pipeline_mode = #tpu.pipeline_mode<synchronous>, transform_indices = @transform_5, window_bounds = array<i64: 16, 128>}, {pipeline_mode = #tpu.pipeline_mode<synchronous>, transform_indices = @transform_6, window_bounds = array<i64: 16, 128>}, {pipeline_mode = #tpu.pipeline_mode<synchronous>, transform_indices = @transform_7, window_bounds = array<i64: 1, 128>}, {pipeline_mode = #tpu.pipeline_mode<synchronous>, transform_indices = @transform_8, window_bounds = array<i64: 1, 128>}, {transform_indices = @transform_9, window_bounds = array<i64: 1, 128, 384>}, {transform_indices = @transform_10, window_bounds = array<i64: 1, 1, 384>}, {transform_indices = @transform_11, window_bounds = array<i64: 1, 128, 128>}, {transform_indices = @transform_12, window_bounds = array<i64: 1, 1, 128>}, {transform_indices = @transform_13, window_bounds = array<i64: 1, 1, 128>}, {transform_indices = @transform_14, window_bounds = array<i64: 1, 1, 128>}, {transform_indices = @transform_15, window_bounds = array<i64: 1, 128, 256>}, {transform_indices = @transform_16, window_bounds = array<i64: 1, 1, 256>}, {transform_indices = @transform_17, window_bounds = array<i64: 1, 256, 128>}, {transform_indices = @transform_18, window_bounds = array<i64: 1, 1, 128>}, {transform_indices = @transform_19, window_bounds = array<i64: 1, 1, 128>}, {transform_indices = @transform_20, window_bounds = array<i64: 1, 1, 128>}, {pipeline_mode = #tpu.pipeline_mode<synchronous>, transform_indices = @transform_21, window_bounds = array<i64: 16, 128>}, {pipeline_mode = #tpu.pipeline_mode<synchronous>, transform_indices = @transform_22, window_bounds = array<i64: 16, 128>}, {pipeline_mode = #tpu.pipeline_mode<synchronous>, transform_indices = @transform_23, window_bounds = array<i64: 2, 128>}]} {
    %c0_i32 = arith.constant 0 : i32
    %0 = arith.cmpi eq, %arg0, %c0_i32 : i32
    %1 = arith.extui %0 : i1 to i32
    %c0_i32_0 = arith.constant 0 : i32
    %2 = arith.cmpi ne, %1, %c0_i32_0 : i32
    scf.if %2 {
      %c0_70 = arith.constant 0 : index
      %c0_71 = arith.constant 0 : index
      %144 = vector.load %arg6[%c0_70, %c0_71] : memref<16x128xf32, #tpu.memory_space<vmem>>, vector<16x128xf32>
      %c0_72 = arith.constant 0 : index
      %c0_73 = arith.constant 0 : index
      %145 = vector.load %arg7[%c0_72, %c0_73] : memref<16x128xf32, #tpu.memory_space<vmem>>, vector<16x128xf32>
      %146 = arith.addf %144, %145 : vector<16x128xf32>
      %c0_74 = arith.constant 0 : index
      %c0_75 = arith.constant 0 : index
      %147 = vector.load %arg8[%c0_74, %c0_75] : memref<1x128xf32, #tpu.memory_space<vmem>>, vector<1x128xf32>
      %c0_76 = arith.constant 0 : index
      %c0_77 = arith.constant 0 : index
      %148 = vector.load %arg9[%c0_76, %c0_77] : memref<1x128xf32, #tpu.memory_space<vmem>>, vector<1x128xf32>
      %cst_78 = arith.constant dense<0.000000e+00> : vector<16xf32>
      %149 = vector.multi_reduction <add>, %146, %cst_78 [1] : vector<16x128xf32> to vector<16xf32>
      %150 = vector.shape_cast %149 : vector<16xf32> to vector<16x1xf32>
      %cst_79 = arith.constant 1.280000e+02 : f32
      %151 = vector.broadcast %cst_79 : f32 to vector<16x1xf32>
      %152 = arith.divf %150, %151 : vector<16x1xf32>
      %153 = vector.broadcast %152 : vector<16x1xf32> to vector<16x128xf32>
      %154 = arith.subf %146, %153 : vector<16x128xf32>
      %155 = arith.mulf %154, %154 : vector<16x128xf32>
      %cst_80 = arith.constant dense<0.000000e+00> : vector<16xf32>
      %156 = vector.multi_reduction <add>, %155, %cst_80 [1] : vector<16x128xf32> to vector<16xf32>
      %157 = vector.shape_cast %156 : vector<16xf32> to vector<16x1xf32>
      %cst_81 = arith.constant 1.280000e+02 : f32
      %158 = vector.broadcast %cst_81 : f32 to vector<16x1xf32>
      %159 = arith.divf %157, %158 : vector<16x1xf32>
      %160 = vector.broadcast %152 : vector<16x1xf32> to vector<16x128xf32>
      %161 = arith.subf %146, %160 : vector<16x128xf32>
      %cst_82 = arith.constant 9.99999996E-13 : f32
      %162 = vector.broadcast %cst_82 : f32 to vector<16x1xf32>
      %163 = arith.addf %159, %162 : vector<16x1xf32>
      %164 = math.rsqrt %163 : vector<16x1xf32>
      %165 = vector.broadcast %164 : vector<16x1xf32> to vector<16x128xf32>
      %166 = arith.mulf %161, %165 : vector<16x128xf32>
      %167 = vector.broadcast %147 : vector<1x128xf32> to vector<16x128xf32>
      %168 = arith.mulf %166, %167 : vector<16x128xf32>
      %169 = vector.broadcast %148 : vector<1x128xf32> to vector<16x128xf32>
      %170 = arith.addf %168, %169 : vector<16x128xf32>
      %c0_83 = arith.constant 0 : index
      %c0_84 = arith.constant 0 : index
      %171 = vector.load %arg25[%c0_83, %c0_84] : memref<16x128xf32, #tpu.memory_space<vmem>>, vector<16x128xf32>
      tpu.vector_store %arg25[%c0_83, %c0_84], %170 {strides = array<i32>} : memref<16x128xf32, #tpu.memory_space<vmem>>, vector<16x128xf32>,
      %cst_85 = arith.constant 0.000000e+00 : f32
      %172 = vector.broadcast %cst_85 : f32 to vector<16x128xf32>
      %c0_86 = arith.constant 0 : index
      %c0_87 = arith.constant 0 : index
      %173 = vector.load %arg26[%c0_86, %c0_87] : memref<16x128xf32, #tpu.memory_space<vmem>>, vector<16x128xf32>
      tpu.vector_store %arg26[%c0_86, %c0_87], %172 {strides = array<i32>} : memref<16x128xf32, #tpu.memory_space<vmem>>, vector<16x128xf32>,
    } else {
    }
    %c0 = arith.constant 0 : index
    %c0_1 = arith.constant 0 : index
    %3 = vector.load %arg25[%c0, %c0_1] : memref<16x128xf32, #tpu.memory_space<vmem>>, vector<16x128xf32>
    %c0_2 = arith.constant 0 : index
    %c0_3 = arith.constant 0 : index
    %4 = vector.load %arg3[%c0_2, %c0_3] : memref<32x128xf32, #tpu.memory_space<vmem>>, vector<32x128xf32>
    %5 = arith.truncf %3 : vector<16x128xf32> to vector<16x128xbf16>
    %c0_4 = arith.constant 0 : index
    %c0_5 = arith.constant 0 : index
    %c0_6 = arith.constant 0 : index
    %6 = vector.load %arg10[%c0_4, %c0_5, %c0_6] : memref<1x128x384xbf16, #tpu.memory_space<vmem>>, vector<1x128x384xbf16>
    %7 = vector.shape_cast %6 : vector<1x128x384xbf16> to vector<128x384xbf16>
    %cst = arith.constant dense<0.000000e+00> : vector<16x384xf32>
    %8 = tpu.matmul %5, %7, %cst {dimension_numbers = #tpu.dot_dimension_numbers<[1], [0], [0], [1], [0, 0, 1, 1], [], []>} : vector<16x128xbf16>, vector<128x384xbf16>, vector<16x384xf32> -> vector<16x384xf32>
    %c0_7 = arith.constant 0 : index
    %c0_8 = arith.constant 0 : index
    %c0_9 = arith.constant 0 : index
    %9 = vector.load %arg11[%c0_7, %c0_8, %c0_9] : memref<1x1x384xf32, #tpu.memory_space<vmem>>, vector<1x1x384xf32>
    %10 = vector.shape_cast %9 : vector<1x1x384xf32> to vector<1x384xf32>
    %11 = vector.broadcast %10 : vector<1x384xf32> to vector<16x384xf32>
    %12 = arith.addf %8, %11 : vector<16x384xf32>
    %13 = vector.extract_strided_slice %12 {offsets = [0, 0], sizes = [16, 128], strides = [1, 1]} : vector<16x384xf32> to vector<16x128xf32>
    %cst_10 = arith.constant 0.176776692 : f32
    %14 = vector.broadcast %cst_10 : f32 to vector<16x128xf32>
    %15 = arith.mulf %13, %14 : vector<16x128xf32>
    %16 = vector.shape_cast %15 : vector<16x128xf32> to vector<2x8x128xf32>
    %17 = arith.truncf %16 : vector<2x8x128xf32> to vector<2x8x128xbf16>
    %18 = vector.extract_strided_slice %12 {offsets = [0, 128], sizes = [16, 128], strides = [1, 1]} : vector<16x384xf32> to vector<16x128xf32>
    %19 = vector.shape_cast %18 : vector<16x128xf32> to vector<2x8x128xf32>
    %20 = vector.extract_strided_slice %12 {offsets = [0, 256], sizes = [16, 128], strides = [1, 1]} : vector<16x384xf32> to vector<16x128xf32>
    %21 = vector.shape_cast %20 : vector<16x128xf32> to vector<2x8x128xf32>
    %22 = tpu.concatenate %19, %19, %19, %19 in 1 : vector<2x8x128xf32>, vector<2x8x128xf32>, vector<2x8x128xf32>, vector<2x8x128xf32> -> vector<2x32x128xf32>
    %23 = vector.shape_cast %4 : vector<32x128xf32> to vector<1x32x128xf32>
    %24 = vector.broadcast %23 : vector<1x32x128xf32> to vector<2x32x128xf32>
    %25 = arith.mulf %22, %24 : vector<2x32x128xf32>
    %26 = arith.truncf %25 : vector<2x32x128xf32> to vector<2x32x128xbf16>
    %27 = tpu.concatenate %21, %21, %21, %21 in 1 : vector<2x8x128xf32>, vector<2x8x128xf32>, vector<2x8x128xf32>, vector<2x8x128xf32> -> vector<2x32x128xf32>
    %28 = vector.shape_cast %4 : vector<32x128xf32> to vector<1x32x128xf32>
    %29 = vector.broadcast %28 : vector<1x32x128xf32> to vector<2x32x128xf32>
    %30 = arith.mulf %27, %29 : vector<2x32x128xf32>
    %31 = arith.truncf %30 : vector<2x32x128xf32> to vector<2x32x128xbf16>
    "tpu.trace_start"() <{level = 10 : i32, message = "bqh,bjh->bqj"}> : () -> ()
    %cst_11 = arith.constant dense<0.000000e+00> : vector<2x8x32xf32>
    %32 = tpu.matmul %17, %26, %cst_11 {dimension_numbers = #tpu.dot_dimension_numbers<[2], [2], [1], [1], [0, 0, 0, 1, 1, 1], [0], [0]>} : vector<2x8x128xbf16>, vector<2x32x128xbf16>, vector<2x8x32xf32> -> vector<2x8x32xf32>
    "tpu.trace_stop"() : () -> ()
    %c0_12 = arith.constant 0 : index
    %c0_13 = arith.constant 0 : index
    %c0_14 = arith.constant 0 : index
    %33 = vector.load %arg1[%c0_12, %c0_13, %c0_14] : memref<2x8x32xf32, #tpu.memory_space<vmem>>, vector<2x8x32xf32>
    %34 = arith.addf %32, %33 : vector<2x8x32xf32>
    %cst_15 = arith.constant dense<0xFF800000> : vector<2x8xf32>
    %35 = vector.multi_reduction <maximumf>, %34, %cst_15 [2] : vector<2x8x32xf32> to vector<2x8xf32>
    %36 = vector.shape_cast %35 : vector<2x8xf32> to vector<2x8x1xf32>
    %37 = vector.broadcast %36 : vector<2x8x1xf32> to vector<2x8x32xf32>
    %38 = arith.subf %34, %37 : vector<2x8x32xf32>
    %39 = math.exp %38 : vector<2x8x32xf32>
    %40 = vector.shape_cast %39 : vector<2x8x32xf32> to vector<16x32xf32>
    %cst_16 = arith.constant dense<0.000000e+00> : vector<16x128xf32>
    %41 = tpu.matmul %40, %4, %cst_16 {dimension_numbers = #tpu.dot_dimension_numbers<[1], [0], [0], [1], [0, 0, 1, 1], [], []>} : vector<16x32xf32>, vector<32x128xf32>, vector<16x128xf32> -> vector<16x128xf32>
    %42 = arith.truncf %39 : vector<2x8x32xf32> to vector<2x8x32xbf16>
    "tpu.trace_start"() <{level = 10 : i32, message = "bqj,bjh->bqh"}> : () -> ()
    %cst_17 = arith.constant dense<0.000000e+00> : vector<2x8x128xf32>
    %43 = tpu.matmul %42, %31, %cst_17 {dimension_numbers = #tpu.dot_dimension_numbers<[2], [1], [1], [2], [0, 0, 0, 1, 1, 2], [0], [0]>} : vector<2x8x32xbf16>, vector<2x32x128xbf16>, vector<2x8x128xf32> -> vector<2x8x128xf32>
    "tpu.trace_stop"() : () -> ()
    %44 = vector.shape_cast %43 : vector<2x8x128xf32> to vector<16x128xf32>
    %45 = arith.divf %44, %41 : vector<16x128xf32>
    %46 = arith.truncf %45 : vector<16x128xf32> to vector<16x128xbf16>
    %c0_18 = arith.constant 0 : index
    %c0_19 = arith.constant 0 : index
    %c0_20 = arith.constant 0 : index
    %47 = vector.load %arg12[%c0_18, %c0_19, %c0_20] : memref<1x128x128xbf16, #tpu.memory_space<vmem>>, vector<1x128x128xbf16>
    %48 = vector.shape_cast %47 : vector<1x128x128xbf16> to vector<128x128xbf16>
    %cst_21 = arith.constant dense<0.000000e+00> : vector<16x128xf32>
    %49 = tpu.matmul %46, %48, %cst_21 {dimension_numbers = #tpu.dot_dimension_numbers<[1], [0], [0], [1], [0, 0, 1, 1], [], []>} : vector<16x128xbf16>, vector<128x128xbf16>, vector<16x128xf32> -> vector<16x128xf32>
    %c0_22 = arith.constant 0 : index
    %c0_23 = arith.constant 0 : index
    %c0_24 = arith.constant 0 : index
    %50 = vector.load %arg13[%c0_22, %c0_23, %c0_24] : memref<1x1x128xf32, #tpu.memory_space<vmem>>, vector<1x1x128xf32>
    %51 = vector.shape_cast %50 : vector<1x1x128xf32> to vector<1x128xf32>
    %52 = vector.broadcast %51 : vector<1x128xf32> to vector<16x128xf32>
    %53 = arith.addf %49, %52 : vector<16x128xf32>
    %54 = arith.addf %53, %3 : vector<16x128xf32>
    %c0_25 = arith.constant 0 : index
    %c0_26 = arith.constant 0 : index
    %c0_27 = arith.constant 0 : index
    %55 = vector.load %arg14[%c0_25, %c0_26, %c0_27] : memref<1x1x128xf32, #tpu.memory_space<vmem>>, vector<1x1x128xf32>
    %56 = vector.shape_cast %55 : vector<1x1x128xf32> to vector<1x128xf32>
    %c0_28 = arith.constant 0 : index
    %c0_29 = arith.constant 0 : index
    %c0_30 = arith.constant 0 : index
    %57 = vector.load %arg15[%c0_28, %c0_29, %c0_30] : memref<1x1x128xf32, #tpu.memory_space<vmem>>, vector<1x1x128xf32>
    %58 = vector.shape_cast %57 : vector<1x1x128xf32> to vector<1x128xf32>
    %cst_31 = arith.constant dense<0.000000e+00> : vector<16xf32>
    %59 = vector.multi_reduction <add>, %54, %cst_31 [1] : vector<16x128xf32> to vector<16xf32>
    %60 = vector.shape_cast %59 : vector<16xf32> to vector<16x1xf32>
    %cst_32 = arith.constant 1.280000e+02 : f32
    %61 = vector.broadcast %cst_32 : f32 to vector<16x1xf32>
    %62 = arith.divf %60, %61 : vector<16x1xf32>
    %63 = vector.broadcast %62 : vector<16x1xf32> to vector<16x128xf32>
    %64 = arith.subf %54, %63 : vector<16x128xf32>
    %65 = arith.mulf %64, %64 : vector<16x128xf32>
    %cst_33 = arith.constant dense<0.000000e+00> : vector<16xf32>
    %66 = vector.multi_reduction <add>, %65, %cst_33 [1] : vector<16x128xf32> to vector<16xf32>
    %67 = vector.shape_cast %66 : vector<16xf32> to vector<16x1xf32>
    %cst_34 = arith.constant 1.280000e+02 : f32
    %68 = vector.broadcast %cst_34 : f32 to vector<16x1xf32>
    %69 = arith.divf %67, %68 : vector<16x1xf32>
    %70 = vector.broadcast %62 : vector<16x1xf32> to vector<16x128xf32>
    %71 = arith.subf %54, %70 : vector<16x128xf32>
    %cst_35 = arith.constant 9.99999996E-13 : f32
    %72 = vector.broadcast %cst_35 : f32 to vector<16x1xf32>
    %73 = arith.addf %69, %72 : vector<16x1xf32>
    %74 = math.rsqrt %73 : vector<16x1xf32>
    %75 = vector.broadcast %74 : vector<16x1xf32> to vector<16x128xf32>
    %76 = arith.mulf %71, %75 : vector<16x128xf32>
    %77 = vector.broadcast %56 : vector<1x128xf32> to vector<16x128xf32>
    %78 = arith.mulf %76, %77 : vector<16x128xf32>
    %79 = vector.broadcast %58 : vector<1x128xf32> to vector<16x128xf32>
    %80 = arith.addf %78, %79 : vector<16x128xf32>
    %81 = arith.truncf %80 : vector<16x128xf32> to vector<16x128xbf16>
    %c0_36 = arith.constant 0 : index
    %c0_37 = arith.constant 0 : index
    %c0_38 = arith.constant 0 : index
    %82 = vector.load %arg16[%c0_36, %c0_37, %c0_38] : memref<1x128x256xbf16, #tpu.memory_space<vmem>>, vector<1x128x256xbf16>
    %83 = vector.shape_cast %82 : vector<1x128x256xbf16> to vector<128x256xbf16>
    %cst_39 = arith.constant dense<0.000000e+00> : vector<16x256xf32>
    %84 = tpu.matmul %81, %83, %cst_39 {dimension_numbers = #tpu.dot_dimension_numbers<[1], [0], [0], [1], [0, 0, 1, 1], [], []>} : vector<16x128xbf16>, vector<128x256xbf16>, vector<16x256xf32> -> vector<16x256xf32>
    %c0_40 = arith.constant 0 : index
    %c0_41 = arith.constant 0 : index
    %c0_42 = arith.constant 0 : index
    %85 = vector.load %arg17[%c0_40, %c0_41, %c0_42] : memref<1x1x256xf32, #tpu.memory_space<vmem>>, vector<1x1x256xf32>
    %86 = vector.shape_cast %85 : vector<1x1x256xf32> to vector<1x256xf32>
    %87 = vector.broadcast %86 : vector<1x256xf32> to vector<16x256xf32>
    %88 = arith.addf %84, %87 : vector<16x256xf32>
    %89 = arith.mulf %88, %88 : vector<16x256xf32>
    %90 = arith.mulf %88, %89 : vector<16x256xf32>
    %cst_43 = arith.constant 4.471500e-02 : f32
    %91 = vector.broadcast %cst_43 : f32 to vector<16x256xf32>
    %92 = arith.mulf %91, %90 : vector<16x256xf32>
    %93 = arith.addf %88, %92 : vector<16x256xf32>
    %cst_44 = arith.constant 0.797884583 : f32
    %94 = vector.broadcast %cst_44 : f32 to vector<16x256xf32>
    %95 = arith.mulf %94, %93 : vector<16x256xf32>
    %96 = math.tanh %95 : vector<16x256xf32>
    %cst_45 = arith.constant 1.000000e+00 : f32
    %97 = vector.broadcast %cst_45 : f32 to vector<16x256xf32>
    %98 = arith.addf %97, %96 : vector<16x256xf32>
    %cst_46 = arith.constant 5.000000e-01 : f32
    %99 = vector.broadcast %cst_46 : f32 to vector<16x256xf32>
    %100 = arith.mulf %99, %98 : vector<16x256xf32>
    %101 = arith.mulf %88, %100 : vector<16x256xf32>
    %102 = arith.truncf %101 : vector<16x256xf32> to vector<16x256xbf16>
    %c0_47 = arith.constant 0 : index
    %c0_48 = arith.constant 0 : index
    %c0_49 = arith.constant 0 : index
    %103 = vector.load %arg18[%c0_47, %c0_48, %c0_49] : memref<1x256x128xbf16, #tpu.memory_space<vmem>>, vector<1x256x128xbf16>
    %104 = vector.shape_cast %103 : vector<1x256x128xbf16> to vector<256x128xbf16>
    %cst_50 = arith.constant dense<0.000000e+00> : vector<16x128xf32>
    %105 = tpu.matmul %102, %104, %cst_50 {dimension_numbers = #tpu.dot_dimension_numbers<[1], [0], [0], [1], [0, 0, 1, 1], [], []>} : vector<16x256xbf16>, vector<256x128xbf16>, vector<16x128xf32> -> vector<16x128xf32>
    %c0_51 = arith.constant 0 : index
    %c0_52 = arith.constant 0 : index
    %c0_53 = arith.constant 0 : index
    %106 = vector.load %arg19[%c0_51, %c0_52, %c0_53] : memref<1x1x128xf32, #tpu.memory_space<vmem>>, vector<1x1x128xf32>
    %107 = vector.shape_cast %106 : vector<1x1x128xf32> to vector<1x128xf32>
    %108 = vector.broadcast %107 : vector<1x128xf32> to vector<16x128xf32>
    %109 = arith.addf %105, %108 : vector<16x128xf32>
    %110 = arith.addf %109, %80 : vector<16x128xf32>
    %c0_54 = arith.constant 0 : index
    %c0_55 = arith.constant 0 : index
    %c0_56 = arith.constant 0 : index
    %111 = vector.load %arg20[%c0_54, %c0_55, %c0_56] : memref<1x1x128xf32, #tpu.memory_space<vmem>>, vector<1x1x128xf32>
    %112 = vector.shape_cast %111 : vector<1x1x128xf32> to vector<1x128xf32>
    %c0_57 = arith.constant 0 : index
    %c0_58 = arith.constant 0 : index
    %c0_59 = arith.constant 0 : index
    %113 = vector.load %arg21[%c0_57, %c0_58, %c0_59] : memref<1x1x128xf32, #tpu.memory_space<vmem>>, vector<1x1x128xf32>
    %114 = vector.shape_cast %113 : vector<1x1x128xf32> to vector<1x128xf32>
    %cst_60 = arith.constant dense<0.000000e+00> : vector<16xf32>
    %115 = vector.multi_reduction <add>, %110, %cst_60 [1] : vector<16x128xf32> to vector<16xf32>
    %116 = vector.shape_cast %115 : vector<16xf32> to vector<16x1xf32>
    %cst_61 = arith.constant 1.280000e+02 : f32
    %117 = vector.broadcast %cst_61 : f32 to vector<16x1xf32>
    %118 = arith.divf %116, %117 : vector<16x1xf32>
    %119 = vector.broadcast %118 : vector<16x1xf32> to vector<16x128xf32>
    %120 = arith.subf %110, %119 : vector<16x128xf32>
    %121 = arith.mulf %120, %120 : vector<16x128xf32>
    %cst_62 = arith.constant dense<0.000000e+00> : vector<16xf32>
    %122 = vector.multi_reduction <add>, %121, %cst_62 [1] : vector<16x128xf32> to vector<16xf32>
    %123 = vector.shape_cast %122 : vector<16xf32> to vector<16x1xf32>
    %cst_63 = arith.constant 1.280000e+02 : f32
    %124 = vector.broadcast %cst_63 : f32 to vector<16x1xf32>
    %125 = arith.divf %123, %124 : vector<16x1xf32>
    %126 = vector.broadcast %118 : vector<16x1xf32> to vector<16x128xf32>
    %127 = arith.subf %110, %126 : vector<16x128xf32>
    %cst_64 = arith.constant 9.99999996E-13 : f32
    %128 = vector.broadcast %cst_64 : f32 to vector<16x1xf32>
    %129 = arith.addf %125, %128 : vector<16x1xf32>
    %130 = math.rsqrt %129 : vector<16x1xf32>
    %131 = vector.broadcast %130 : vector<16x1xf32> to vector<16x128xf32>
    %132 = arith.mulf %127, %131 : vector<16x128xf32>
    %133 = vector.broadcast %112 : vector<1x128xf32> to vector<16x128xf32>
    %134 = arith.mulf %132, %133 : vector<16x128xf32>
    %135 = vector.broadcast %114 : vector<1x128xf32> to vector<16x128xf32>
    %136 = arith.addf %134, %135 : vector<16x128xf32>
    %c0_65 = arith.constant 0 : index
    %c0_66 = arith.constant 0 : index
    %137 = vector.load %arg25[%c0_65, %c0_66] : memref<16x128xf32, #tpu.memory_space<vmem>>, vector<16x128xf32>
    tpu.vector_store %arg25[%c0_65, %c0_66], %136 {strides = array<i32>} : memref<16x128xf32, #tpu.memory_space<vmem>>, vector<16x128xf32>,
    %c0_i32_67 = arith.constant 0 : i32
    %138 = arith.cmpi sge, %arg0, %c0_i32_67 : i32
    %139 = arith.extui %138 : i1 to i32
    %c0_i32_68 = arith.constant 0 : i32
    %140 = arith.cmpi ne, %139, %c0_i32_68 : i32
    scf.if %140 {
      %c0_70 = arith.constant 0 : index
      %c0_71 = arith.constant 0 : index
      %144 = vector.load %arg26[%c0_70, %c0_71] : memref<16x128xf32, #tpu.memory_space<vmem>>, vector<16x128xf32>
      %145 = arith.addf %144, %136 : vector<16x128xf32>
      %c0_72 = arith.constant 0 : index
      %c0_73 = arith.constant 0 : index
      %146 = vector.load %arg26[%c0_72, %c0_73] : memref<16x128xf32, #tpu.memory_space<vmem>>, vector<16x128xf32>
      tpu.vector_store %arg26[%c0_72, %c0_73], %145 {strides = array<i32>} : memref<16x128xf32, #tpu.memory_space<vmem>>, vector<16x128xf32>,
    } else {
    }
    %c1_i32 = arith.constant 1 : i32
    %141 = arith.cmpi eq, %arg0, %c1_i32 : i32
    %142 = arith.extui %141 : i1 to i32
    %c0_i32_69 = arith.constant 0 : i32
    %143 = arith.cmpi ne, %142, %c0_i32_69 : i32
    scf.if %143 {
      %c0_70 = arith.constant 0 : index
      %c0_71 = arith.constant 0 : index
      %144 = vector.load %arg22[%c0_70, %c0_71] : memref<16x128xf32, #tpu.memory_space<vmem>>, vector<16x128xf32>
      tpu.vector_store %arg22[%c0_70, %c0_71], %136 {strides = array<i32>} : memref<16x128xf32, #tpu.memory_space<vmem>>, vector<16x128xf32>,
      %c0_72 = arith.constant 0 : index
      %c0_73 = arith.constant 0 : index
      %145 = vector.load %arg26[%c0_72, %c0_73] : memref<16x128xf32, #tpu.memory_space<vmem>>, vector<16x128xf32>
      %cst_74 = arith.constant 2.500000e-01 : f32
      %146 = vector.broadcast %cst_74 : f32 to vector<16x128xf32>
      %147 = arith.mulf %145, %146 : vector<16x128xf32>
      %c0_75 = arith.constant 0 : index
      %c0_76 = arith.constant 0 : index
      %148 = vector.load %arg2[%c0_75, %c0_76] : memref<16x1xf32, #tpu.memory_space<vmem>>, vector<16x1xf32>
      %149 = vector.broadcast %148 : vector<16x1xf32> to vector<16x128xf32>
      %150 = arith.mulf %147, %149 : vector<16x128xf32>
      %c0_77 = arith.constant 0 : index
      %c0_78 = arith.constant 0 : index
      %151 = vector.load %arg23[%c0_77, %c0_78] : memref<16x128xf32, #tpu.memory_space<vmem>>, vector<16x128xf32>
      tpu.vector_store %arg23[%c0_77, %c0_78], %150 {strides = array<i32>} : memref<16x128xf32, #tpu.memory_space<vmem>>, vector<16x128xf32>,
      %c0_79 = arith.constant 0 : index
      %c0_80 = arith.constant 0 : index
      %152 = vector.load %arg4[%c0_79, %c0_80] : memref<2x16xf32, #tpu.memory_space<vmem>>, vector<2x16xf32>
      %cst_81 = arith.constant dense<0.000000e+00> : vector<2x128xf32>
      %153 = tpu.matmul %152, %150, %cst_81 {dimension_numbers = #tpu.dot_dimension_numbers<[1], [0], [0], [1], [0, 0, 1, 1], [], []>} : vector<2x16xf32>, vector<16x128xf32>, vector<2x128xf32> -> vector<2x128xf32>
      %c0_82 = arith.constant 0 : index
      %c0_83 = arith.constant 0 : index
      %154 = vector.load %arg5[%c0_82, %c0_83] : memref<2x1xf32, #tpu.memory_space<vmem>>, vector<2x1xf32>
      %155 = vector.broadcast %154 : vector<2x1xf32> to vector<2x128xf32>
      %156 = arith.mulf %153, %155 : vector<2x128xf32>
      %c0_84 = arith.constant 0 : index
      %c0_85 = arith.constant 0 : index
      %157 = vector.load %arg24[%c0_84, %c0_85] : memref<2x128xf32, #tpu.memory_space<vmem>>, vector<2x128xf32>
      tpu.vector_store %arg24[%c0_84, %c0_85], %156 {strides = array<i32>} : memref<2x128xf32, #tpu.memory_space<vmem>>, vector<2x128xf32>,
    } else {
    }
    return
  }
  func.func @transform_0(%arg0: i32) -> (i32, i32, i32) {
    %c0_i32 = arith.constant 0 : i32
    %c0_i32_0 = arith.constant 0 : i32
    %c0_i32_1 = arith.constant 0 : i32
    %c0_i32_2 = arith.constant 0 : i32
    return %c0_i32, %c0_i32_0, %c0_i32_1 : i32, i32, i32
  }
  func.func @transform_1(%arg0: i32) -> (i32, i32) {
    %c0_i32 = arith.constant 0 : i32
    %c0_i32_0 = arith.constant 0 : i32
    %c0_i32_1 = arith.constant 0 : i32
    return %c0_i32, %c0_i32_0 : i32, i32
  }
  func.func @transform_2(%arg0: i32) -> (i32, i32) {
    %c0_i32 = arith.constant 0 : i32
    %c0_i32_0 = arith.constant 0 : i32
    %c0_i32_1 = arith.constant 0 : i32
    return %c0_i32, %c0_i32_0 : i32, i32
  }
  func.func @transform_3(%arg0: i32) -> (i32, i32) {
    %c0_i32 = arith.constant 0 : i32
    %c0_i32_0 = arith.constant 0 : i32
    %c0_i32_1 = arith.constant 0 : i32
    return %c0_i32, %c0_i32_0 : i32, i32
  }
  func.func @transform_4(%arg0: i32) -> (i32, i32) {
    %c0_i32 = arith.constant 0 : i32
    %c0_i32_0 = arith.constant 0 : i32
    %c0_i32_1 = arith.constant 0 : i32
    return %c0_i32, %c0_i32_0 : i32, i32
  }
  func.func @transform_5(%arg0: i32) -> (i32, i32) {
    %c0_i32 = arith.constant 0 : i32
    %c0_i32_0 = arith.constant 0 : i32
    %c0_i32_1 = arith.constant 0 : i32
    return %c0_i32, %c0_i32_0 : i32, i32
  }
  func.func @transform_6(%arg0: i32) -> (i32, i32) {
    %c0_i32 = arith.constant 0 : i32
    %c0_i32_0 = arith.constant 0 : i32
    %c0_i32_1 = arith.constant 0 : i32
    return %c0_i32, %c0_i32_0 : i32, i32
  }
  func.func @transform_7(%arg0: i32) -> (i32, i32) {
    %c0_i32 = arith.constant 0 : i32
    %c0_i32_0 = arith.constant 0 : i32
    %c0_i32_1 = arith.constant 0 : i32
    return %c0_i32, %c0_i32_0 : i32, i32
  }
  func.func @transform_8(%arg0: i32) -> (i32, i32) {
    %c0_i32 = arith.constant 0 : i32
    %c0_i32_0 = arith.constant 0 : i32
    %c0_i32_1 = arith.constant 0 : i32
    return %c0_i32, %c0_i32_0 : i32, i32
  }
  func.func @transform_9(%arg0: i32) -> (i32, i32, i32) {
    %c0_i32 = arith.constant 0 : i32
    %c0_i32_0 = arith.constant 0 : i32
    %c0_i32_1 = arith.constant 0 : i32
    return %arg0, %c0_i32, %c0_i32_0 : i32, i32, i32
  }
  func.func @transform_10(%arg0: i32) -> (i32, i32, i32) {
    %c0_i32 = arith.constant 0 : i32
    %c0_i32_0 = arith.constant 0 : i32
    %c0_i32_1 = arith.constant 0 : i32
    return %arg0, %c0_i32, %c0_i32_0 : i32, i32, i32
  }
  func.func @transform_11(%arg0: i32) -> (i32, i32, i32) {
    %c0_i32 = arith.constant 0 : i32
    %c0_i32_0 = arith.constant 0 : i32
    %c0_i32_1 = arith.constant 0 : i32
    return %arg0, %c0_i32, %c0_i32_0 : i32, i32, i32
  }
  func.func @transform_12(%arg0: i32) -> (i32, i32, i32) {
    %c0_i32 = arith.constant 0 : i32
    %c0_i32_0 = arith.constant 0 : i32
    %c0_i32_1 = arith.constant 0 : i32
    return %arg0, %c0_i32, %c0_i32_0 : i32, i32, i32
  }
  func.func @transform_13(%arg0: i32) -> (i32, i32, i32) {
    %c0_i32 = arith.constant 0 : i32
    %c0_i32_0 = arith.constant 0 : i32
    %c0_i32_1 = arith.constant 0 : i32
    return %arg0, %c0_i32, %c0_i32_0 : i32, i32, i32
  }
  func.func @transform_14(%arg0: i32) -> (i32, i32, i32) {
    %c0_i32 = arith.constant 0 : i32
    %c0_i32_0 = arith.constant 0 : i32
    %c0_i32_1 = arith.constant 0 : i32
    return %arg0, %c0_i32, %c0_i32_0 : i32, i32, i32
  }
  func.func @transform_15(%arg0: i32) -> (i32, i32, i32) {
    %c0_i32 = arith.constant 0 : i32
    %c0_i32_0 = arith.constant 0 : i32
    %c0_i32_1 = arith.constant 0 : i32
    return %arg0, %c0_i32, %c0_i32_0 : i32, i32, i32
  }
  func.func @transform_16(%arg0: i32) -> (i32, i32, i32) {
    %c0_i32 = arith.constant 0 : i32
    %c0_i32_0 = arith.constant 0 : i32
    %c0_i32_1 = arith.constant 0 : i32
    return %arg0, %c0_i32, %c0_i32_0 : i32, i32, i32
  }
  func.func @transform_17(%arg0: i32) -> (i32, i32, i32) {
    %c0_i32 = arith.constant 0 : i32
    %c0_i32_0 = arith.constant 0 : i32
    %c0_i32_1 = arith.constant 0 : i32
    return %arg0, %c0_i32, %c0_i32_0 : i32, i32, i32
  }
  func.func @transform_18(%arg0: i32) -> (i32, i32, i32) {
    %c0_i32 = arith.constant 0 : i32
    %c0_i32_0 = arith.constant 0 : i32
    %c0_i32_1 = arith.constant 0 : i32
    return %arg0, %c0_i32, %c0_i32_0 : i32, i32, i32
  }
  func.func @transform_19(%arg0: i32) -> (i32, i32, i32) {
    %c0_i32 = arith.constant 0 : i32
    %c0_i32_0 = arith.constant 0 : i32
    %c0_i32_1 = arith.constant 0 : i32
    return %arg0, %c0_i32, %c0_i32_0 : i32, i32, i32
  }
  func.func @transform_20(%arg0: i32) -> (i32, i32, i32) {
    %c0_i32 = arith.constant 0 : i32
    %c0_i32_0 = arith.constant 0 : i32
    %c0_i32_1 = arith.constant 0 : i32
    return %arg0, %c0_i32, %c0_i32_0 : i32, i32, i32
  }
  func.func @transform_21(%arg0: i32) -> (i32, i32) {
    %c0_i32 = arith.constant 0 : i32
    %c0_i32_0 = arith.constant 0 : i32
    %c0_i32_1 = arith.constant 0 : i32
    return %c0_i32, %c0_i32_0 : i32, i32
  }
  func.func @transform_22(%arg0: i32) -> (i32, i32) {
    %c0_i32 = arith.constant 0 : i32
    %c0_i32_0 = arith.constant 0 : i32
    %c0_i32_1 = arith.constant 0 : i32
    return %c0_i32, %c0_i32_0 : i32, i32
  }
  func.func @transform_23(%arg0: i32) -> (i32, i32) {
    %c0_i32 = arith.constant 0 : i32
    %c0_i32_0 = arith.constant 0 : i32
    %c0_i32_1 = arith.constant 0 : i32
    return %c0_i32, %c0_i32_0 : i32, i32
  }
}

</mosaic_0001>

<llo_original>
// kernel: _lambda_.1
$region0: #{_lambda_.1}
  #allocation0 [shape = 'u32[]', space=smem, size = 0x4, offset = 0x4, fixed_abs, tag = 'smem constant byte address 0x4 - core index']
  #allocation1 [shape = 'u32[144,128]{1,0:T(1,128)}', space=vmem, size = 0x12000, scoped, tag = 'internal scratch']
  #allocation2 [shape = 'f32[16,128]{1,0:T(8,128)}', space=vmem, size = 0x2000, scoped, tag = 'scratch operand']
  #allocation3 [shape = 'f32[16,128]{1,0:T(8,128)}', space=vmem, size = 0x2000, scoped, tag = 'scratch operand']
  %s0 = inlined_call_operand.vmem [shape: f32[2,8,32], index: 0, kind: input, shape index: {}]
  %s1 = inlined_call_operand.vmem [shape: f32[16,1], index: 1, kind: input, shape index: {}]
  %s2 = inlined_call_operand.vmem [shape: f32[32,128], index: 2, kind: input, shape index: {}]
  %s3 = inlined_call_operand.vmem [shape: f32[2,16], index: 3, kind: input, shape index: {}]
  %s4 = inlined_call_operand.vmem [shape: f32[2,1], index: 4, kind: input, shape index: {}]
  %s5 = inlined_call_operand.vmem [shape: f32[16,128], index: 5, kind: input, shape index: {}]
  %s6 = inlined_call_operand.vmem [shape: f32[16,128], index: 6, kind: input, shape index: {}]
  %s7 = inlined_call_operand.vmem [shape: f32[1,128], index: 7, kind: input, shape index: {}]
  %s8 = inlined_call_operand.vmem [shape: f32[1,128], index: 8, kind: input, shape index: {}]
  %s9 = inlined_call_operand.hbm [shape: bf16[2,128,384], index: 9, kind: input, shape index: {}]
  %s10 = inlined_call_operand.vmem [shape: f32[2,1,384], index: 10, kind: input, shape index: {}]
  %s11 = inlined_call_operand.hbm [shape: bf16[2,128,128], index: 11, kind: input, shape index: {}]
  %s12 = inlined_call_operand.vmem [shape: f32[2,1,128], index: 12, kind: input, shape index: {}, may-alias: {12,14,18,20}]
  %s13 = inlined_call_operand.vmem [shape: f32[2,1,128], index: 13, kind: input, shape index: {}, may-alias: {13,19}]
  %s14 = inlined_call_operand.vmem [shape: f32[2,1,128], index: 14, kind: input, shape index: {}, may-alias: {12,14,18,20}]
  %s15 = inlined_call_operand.vmem [shape: bf16[2,128,256], index: 15, kind: input, shape index: {}]
  %s16 = inlined_call_operand.vmem [shape: f32[2,1,256], index: 16, kind: input, shape index: {}]
  %s17 = inlined_call_operand.hbm [shape: bf16[2,256,128], index: 17, kind: input, shape index: {}]
  %s18 = inlined_call_operand.vmem [shape: f32[2,1,128], index: 18, kind: input, shape index: {}, may-alias: {12,14,18,20}]
  %s19 = inlined_call_operand.vmem [shape: f32[2,1,128], index: 19, kind: input, shape index: {}, may-alias: {13,19}]
  %s20 = inlined_call_operand.vmem [shape: f32[2,1,128], index: 20, kind: input, shape index: {}, may-alias: {12,14,18,20}]
  %s21 = inlined_call_operand.hbm [shape: f32[16,128], index: 21, kind: output, shape index: {0}]
  %s22 = inlined_call_operand.hbm [shape: f32[16,128], index: 22, kind: output, shape index: {1}]
  %s23 = inlined_call_operand.hbm [shape: f32[2,128], index: 23, kind: output, shape index: {2}]
  %24 = xla_tuple %s21, %s22, %s23
  %s25 = sld [smem:[#allocation0]]
  $region157: #{_lambda_.1} parent=0
    _
  %s27 = ssub.s32 1, %s25
  %s28 = scalar_select 0, %s27, %s25
  $region1: #{_lambda_.1} parent=0
    #allocation4 [shape = 'u8[196608]{0}', space=vmem, size = 0x30000, scoped, tag = 'input window, operand 9']
    #allocation5 [shape = 's32[2]{0}', space=sflag, size = 0x8, scoped, tag = 'scoped memory for _lambda_.1']
    #allocation6 [shape = 's32[2]{0}', space=sflag, size = 0x8, scoped, tag = 'scoped memory for _lambda_.1']
    #allocation7 [shape = 'u8[65536]{0}', space=vmem, size = 0x10000, scoped, tag = 'input window, operand 11']
    #allocation8 [shape = 's32[2]{0}', space=sflag, size = 0x8, scoped, tag = 'scoped memory for _lambda_.1']
    #allocation9 [shape = 'u8[131072]{0}', space=vmem, size = 0x20000, scoped, tag = 'input window, operand 17']
    #allocation10 [shape = 'u8[8192]{0}', space=vmem, size = 0x2000, scoped, tag = 'output window, operand 0, single buffered']
    #allocation11 [shape = 'u8[8192]{0}', space=vmem, size = 0x2000, scoped, tag = 'output window, operand 1, single buffered']
    #allocation12 [shape = 's32[1]{0}', space=sflag, size = 0x4, scoped, tag = 'scoped memory for _lambda_.1']
    #allocation13 [shape = 'u8[1024]{0}', space=vmem, size = 0x400, scoped, tag = 'output window, operand 2, single buffered']
    %29 = vsyncpa [#allocation5], 0
    %s30 = scalar_lea.sflag [#allocation5], 1
    %31 = vsyncpa %s30, 0
    %32 = vsyncpa [#allocation8], 0
    %s33 = scalar_lea.sflag [#allocation8], 1
    %34 = vsyncpa %s33, 0
    %35 = vsyncpa [#allocation6], 0
    %36 = vsyncpa [#allocation12], 0
    loop: start=0, step=1, limit=4
    $region2: #{_lambda_.1} parent=1 // loop_pre_header
      _
    $region3: #{_lambda_.1} parent=1 // loop_header
      %s38 = sphi 0, %s42
      %p39 = scmp.ge.s32.totalorder %s38, 4
      %s46 = sphi 0, %s46
      %s48 = sphi 0, %s46
      %s49 = sphi 0, %s48
      %s63 = sphi 0, %s49
      %s67 = sphi 0, %s67
      %s69 = sphi 0, %s67
      %s70 = sphi 0, %s69
      %s84 = sphi 0, %s70
      %s88 = sphi 0, %s88
      %s90 = sphi 0, %s88
      %s91 = sphi 0, %s90
      %s105 = sphi 0, %s91
      %s109 = sphi 0, %s109
      %s111 = sphi 0, %s109
      %s112 = sphi 0, %s111
      %s126 = sphi 0, %s112
      %s130 = sphi 0, %s130
      %s132 = sphi 0, %s130
      %s133 = sphi 0, %s132
      %s147 = sphi 0, %s133
      %s151 = sphi 0, %s151
      %s153 = sphi 0, %s151
      %s154 = sphi 0, %s153
      %s168 = sphi 0, %s154
      %s172 = sphi 0, %s172
      %s174 = sphi 0, %s172
      %s175 = sphi 0, %s174
      %s189 = sphi 0, %s175
      %s193 = sphi 0, %s193
      %s195 = sphi 0, %s193
      %s196 = sphi 0, %s195
      %s210 = sphi 0, %s196
      %s214 = sphi 0, %s214
      %s216 = sphi 0, %s214
      %s217 = sphi 0, %s216
      %s231 = sphi 0, %s217
      %s237 = sphi 0, %s239
      %s240 = sphi 0, %s237
      %s241 = sphi 0, %s240
      %s257 = sphi 0, %s241
      %s263 = sphi 0, %s265
      %s266 = sphi 0, %s263
      %s267 = sphi 0, %s266
      %s283 = sphi 0, %s267
      %s289 = sphi 0, %s291
      %s292 = sphi 0, %s289
      %s293 = sphi 0, %s292
      %s309 = sphi 0, %s293
      %s315 = sphi 0, %s317
      %s318 = sphi 0, %s315
      %s319 = sphi 0, %s318
      %s335 = sphi 0, %s319
      %s341 = sphi 0, %s343
      %s344 = sphi 0, %s341
      %s345 = sphi 0, %s344
      %s361 = sphi 0, %s345
      %s367 = sphi 0, %s369
      %s370 = sphi 0, %s367
      %s371 = sphi 0, %s370
      %s387 = sphi 0, %s371
      %s393 = sphi 0, %s395
      %s396 = sphi 0, %s393
      %s397 = sphi 0, %s396
      %s413 = sphi 0, %s397
      %s419 = sphi 0, %s421
      %s422 = sphi 0, %s419
      %s423 = sphi 0, %s422
      %s439 = sphi 0, %s423
      %s445 = sphi 0, %s447
      %s448 = sphi 0, %s445
      %s449 = sphi 0, %s448
      %s465 = sphi 0, %s449
      %s471 = sphi 0, %s473
      %s474 = sphi 0, %s471
      %s475 = sphi 0, %s474
      %s491 = sphi 0, %s475
      %s497 = sphi 0, %s499
      %s500 = sphi 0, %s497
      %s501 = sphi 0, %s500
      %s517 = sphi 0, %s501
      %s523 = sphi 0, %s525
      %s526 = sphi 0, %s523
      %s527 = sphi 0, %s526
      %s543 = sphi 0, %s527
      %s547 = sphi 0, %s547
      %s549 = sphi 0, %s547
      %s550 = sphi 0, %s549
      %s564 = sphi 0, %s550
      %s568 = sphi 0, %s568
      %s570 = sphi 0, %s568
      %s571 = sphi 0, %s570
      %s585 = sphi 0, %s571
      %s589 = sphi 0, %s589
      %s591 = sphi 0, %s589
      %s592 = sphi 0, %s591
      %s606 = sphi 0, %s592
    $region4: #{_lambda_.1} parent=1 // loop_header_branch
      %41 = sbr.rel (%p39) target = $region8
    $region5: #{_lambda_.1} parent=1 // loop_body
      %s43 = ssub.s32 %s38, 1
      %s44 = ssub.s32 %s38, 2
      %s45 = sadd.s32 %s38, 1
      %s47 = sadd.s32 %s46, 1
      %p50 = scmp.eq.s32.totalorder %s38, 1
      %p51 = scmp.ne.s32.totalorder %s46, %s48
      %p52 = scmp.eq.s32.totalorder %s38, 0
      %p53 = por %p51, %p52
      %p54 = scmp.ne.s32.totalorder %s46, %s48
      %p55 = scmp.eq.s32.totalorder %s43, 1
      %p56 = por %p54, %p55
      %p57 = scmp.ne.s32.totalorder %s48, %s49
      %p58 = scmp.eq.s32.totalorder %s43, 0
      %p59 = por %p57, %p58
      %p60 = scmp.ne.s32.totalorder %s48, %s49
      %p61 = scmp.eq.s32.totalorder %s44, 1
      %p62 = por %p60, %p61
      %p64 = scmp.ne.s32.totalorder %s49, %s63
      %p65 = scmp.eq.s32.totalorder %s44, 0
      %p66 = por %p64, %p65
      %s68 = sadd.s32 %s67, 1
      %p71 = scmp.eq.s32.totalorder %s38, 1
      %p72 = scmp.ne.s32.totalorder %s67, %s69
      %p73 = scmp.eq.s32.totalorder %s38, 0
      %p74 = por %p72, %p73
      %p75 = scmp.ne.s32.totalorder %s67, %s69
      %p76 = scmp.eq.s32.totalorder %s43, 1
      %p77 = por %p75, %p76
      %p78 = scmp.ne.s32.totalorder %s69, %s70
      %p79 = scmp.eq.s32.totalorder %s43, 0
      %p80 = por %p78, %p79
      %p81 = scmp.ne.s32.totalorder %s69, %s70
      %p82 = scmp.eq.s32.totalorder %s44, 1
      %p83 = por %p81, %p82
      %p85 = scmp.ne.s32.totalorder %s70, %s84
      %p86 = scmp.eq.s32.totalorder %s44, 0
      %p87 = por %p85, %p86
      %s89 = sadd.s32 %s88, 1
      %p92 = scmp.eq.s32.totalorder %s38, 1
      %p93 = scmp.ne.s32.totalorder %s88, %s90
      %p94 = scmp.eq.s32.totalorder %s38, 0
      %p95 = por %p93, %p94
      %p96 = scmp.ne.s32.totalorder %s88, %s90
      %p97 = scmp.eq.s32.totalorder %s43, 1
      %p98 = por %p96, %p97
      %p99 = scmp.ne.s32.totalorder %s90, %s91
      %p100 = scmp.eq.s32.totalorder %s43, 0
      %p101 = por %p99, %p100
      %p102 = scmp.ne.s32.totalorder %s90, %s91
      %p103 = scmp.eq.s32.totalorder %s44, 1
      %p104 = por %p102, %p103
      %p106 = scmp.ne.s32.totalorder %s91, %s105
      %p107 = scmp.eq.s32.totalorder %s44, 0
      %p108 = por %p106, %p107
      %s110 = sadd.s32 %s109, 1
      %p113 = scmp.eq.s32.totalorder %s38, 1
      %p114 = scmp.ne.s32.totalorder %s109, %s111
      %p115 = scmp.eq.s32.totalorder %s38, 0
      %p116 = por %p114, %p115
      %p117 = scmp.ne.s32.totalorder %s109, %s111
      %p118 = scmp.eq.s32.totalorder %s43, 1
      %p119 = por %p117, %p118
      %p120 = scmp.ne.s32.totalorder %s111, %s112
      %p121 = scmp.eq.s32.totalorder %s43, 0
      %p122 = por %p120, %p121
      %p123 = scmp.ne.s32.totalorder %s111, %s112
      %p124 = scmp.eq.s32.totalorder %s44, 1
      %p125 = por %p123, %p124
      %p127 = scmp.ne.s32.totalorder %s112, %s126
      %p128 = scmp.eq.s32.totalorder %s44, 0
      %p129 = por %p127, %p128
      %s131 = sadd.s32 %s130, 1
      %p134 = scmp.eq.s32.totalorder %s38, 1
      %p135 = scmp.ne.s32.totalorder %s130, %s132
      %p136 = scmp.eq.s32.totalorder %s38, 0
      %p137 = por %p135, %p136
      %p138 = scmp.ne.s32.totalorder %s130, %s132
      %p139 = scmp.eq.s32.totalorder %s43, 1
      %p140 = por %p138, %p139
      %p141 = scmp.ne.s32.totalorder %s132, %s133
      %p142 = scmp.eq.s32.totalorder %s43, 0
      %p143 = por %p141, %p142
      %p144 = scmp.ne.s32.totalorder %s132, %s133
      %p145 = scmp.eq.s32.totalorder %s44, 1
      %p146 = por %p144, %p145
      %p148 = scmp.ne.s32.totalorder %s133, %s147
      %p149 = scmp.eq.s32.totalorder %s44, 0
      %p150 = por %p148, %p149
      %s152 = sadd.s32 %s151, 1
      %p155 = scmp.eq.s32.totalorder %s38, 1
      %p156 = scmp.ne.s32.totalorder %s151, %s153
      %p157 = scmp.eq.s32.totalorder %s38, 0
      %p158 = por %p156, %p157
      %p159 = scmp.ne.s32.totalorder %s151, %s153
      %p160 = scmp.eq.s32.totalorder %s43, 1
      %p161 = por %p159, %p160
      %p162 = scmp.ne.s32.totalorder %s153, %s154
      %p163 = scmp.eq.s32.totalorder %s43, 0
      %p164 = por %p162, %p163
      %p165 = scmp.ne.s32.totalorder %s153, %s154
      %p166 = scmp.eq.s32.totalorder %s44, 1
      %p167 = por %p165, %p166
      %p169 = scmp.ne.s32.totalorder %s154, %s168
      %p170 = scmp.eq.s32.totalorder %s44, 0
      %p171 = por %p169, %p170
      %s173 = sadd.s32 %s172, 1
      %p176 = scmp.eq.s32.totalorder %s38, 1
      %p177 = scmp.ne.s32.totalorder %s172, %s174
      %p178 = scmp.eq.s32.totalorder %s38, 0
      %p179 = por %p177, %p178
      %p180 = scmp.ne.s32.totalorder %s172, %s174
      %p181 = scmp.eq.s32.totalorder %s43, 1
      %p182 = por %p180, %p181
      %p183 = scmp.ne.s32.totalorder %s174, %s175
      %p184 = scmp.eq.s32.totalorder %s43, 0
      %p185 = por %p183, %p184
      %p186 = scmp.ne.s32.totalorder %s174, %s175
      %p187 = scmp.eq.s32.totalorder %s44, 1
      %p188 = por %p186, %p187
      %p190 = scmp.ne.s32.totalorder %s175, %s189
      %p191 = scmp.eq.s32.totalorder %s44, 0
      %p192 = por %p190, %p191
      %s194 = sadd.s32 %s193, 1
      %p197 = scmp.eq.s32.totalorder %s38, 1
      %p198 = scmp.ne.s32.totalorder %s193, %s195
      %p199 = scmp.eq.s32.totalorder %s38, 0
      %p200 = por %p198, %p199
      %p201 = scmp.ne.s32.totalorder %s193, %s195
      %p202 = scmp.eq.s32.totalorder %s43, 1
      %p203 = por %p201, %p202
      %p204 = scmp.ne.s32.totalorder %s195, %s196
      %p205 = scmp.eq.s32.totalorder %s43, 0
      %p206 = por %p204, %p205
      %p207 = scmp.ne.s32.totalorder %s195, %s196
      %p208 = scmp.eq.s32.totalorder %s44, 1
      %p209 = por %p207, %p208
      %p211 = scmp.ne.s32.totalorder %s196, %s210
      %p212 = scmp.eq.s32.totalorder %s44, 0
      %p213 = por %p211, %p212
      %s215 = sadd.s32 %s214, 1
      %p218 = scmp.eq.s32.totalorder %s38, 1
      %p219 = scmp.ne.s32.totalorder %s214, %s216
      %p220 = scmp.eq.s32.totalorder %s38, 0
      %p221 = por %p219, %p220
      %p222 = scmp.ne.s32.totalorder %s214, %s216
      %p223 = scmp.eq.s32.totalorder %s43, 1
      %p224 = por %p222, %p223
      %p225 = scmp.ne.s32.totalorder %s216, %s217
      %p226 = scmp.eq.s32.totalorder %s43, 0
      %p227 = por %p225, %p226
      %p228 = scmp.ne.s32.totalorder %s216, %s217
      %p229 = scmp.eq.s32.totalorder %s44, 1
      %p230 = por %p228, %p229
      %p232 = scmp.ne.s32.totalorder %s217, %s231
      %p233 = scmp.eq.s32.totalorder %s44, 0
      %p234 = por %p232, %p233
      %s235 = ssub.s32 %s38, %s45
      %p236 = scmp.eq.s32.totalorder %s235, 0
      %s238 = sadd.s32 %s237, 1
      %s239 = scalar_select %p236, %s237, %s238
      %p242 = pneg %p236
      %p243 = scmp.eq.s32.totalorder %s38, 1
      %p244 = por %p242, %p243
      %p245 = scmp.ne.s32.totalorder %s237, %s240
      %p246 = scmp.eq.s32.totalorder %s38, 0
      %p247 = por %p245, %p246
      %p248 = scmp.ne.s32.totalorder %s237, %s240
      %p249 = scmp.eq.s32.totalorder %s43, 1
      %p250 = por %p248, %p249
      %p251 = scmp.ne.s32.totalorder %s240, %s241
      %p252 = scmp.eq.s32.totalorder %s43, 0
      %p253 = por %p251, %p252
      %p254 = scmp.ne.s32.totalorder %s240, %s241
      %p255 = scmp.eq.s32.totalorder %s44, 1
      %p256 = por %p254, %p255
      %p258 = scmp.ne.s32.totalorder %s241, %s257
      %p259 = scmp.eq.s32.totalorder %s44, 0
      %p260 = por %p258, %p259
      %s261 = ssub.s32 %s38, %s45
      %p262 = scmp.eq.s32.totalorder %s261, 0
      %s264 = sadd.s32 %s263, 1
      %s265 = scalar_select %p262, %s263, %s264
      %p268 = pneg %p262
      %p269 = scmp.eq.s32.totalorder %s38, 1
      %p270 = por %p268, %p269
      %p271 = scmp.ne.s32.totalorder %s263, %s266
      %p272 = scmp.eq.s32.totalorder %s38, 0
      %p273 = por %p271, %p272
      %p274 = scmp.ne.s32.totalorder %s263, %s266
      %p275 = scmp.eq.s32.totalorder %s43, 1
      %p276 = por %p274, %p275
      %p277 = scmp.ne.s32.totalorder %s266, %s267
      %p278 = scmp.eq.s32.totalorder %s43, 0
      %p279 = por %p277, %p278
      %p280 = scmp.ne.s32.totalorder %s266, %s267
      %p281 = scmp.eq.s32.totalorder %s44, 1
      %p282 = por %p280, %p281
      %p284 = scmp.ne.s32.totalorder %s267, %s283
      %p285 = scmp.eq.s32.totalorder %s44, 0
      %p286 = por %p284, %p285
      %s287 = ssub.s32 %s38, %s45
      %p288 = scmp.eq.s32.totalorder %s287, 0
      %s290 = sadd.s32 %s289, 1
      %s291 = scalar_select %p288, %s289, %s290
      %p294 = pneg %p288
      %p295 = scmp.eq.s32.totalorder %s38, 1
      %p296 = por %p294, %p295
      %p297 = scmp.ne.s32.totalorder %s289, %s292
      %p298 = scmp.eq.s32.totalorder %s38, 0
      %p299 = por %p297, %p298
      %p300 = scmp.ne.s32.totalorder %s289, %s292
      %p301 = scmp.eq.s32.totalorder %s43, 1
      %p302 = por %p300, %p301
      %p303 = scmp.ne.s32.totalorder %s292, %s293
      %p304 = scmp.eq.s32.totalorder %s43, 0
      %p305 = por %p303, %p304
      %p306 = scmp.ne.s32.totalorder %s292, %s293
      %p307 = scmp.eq.s32.totalorder %s44, 1
      %p308 = por %p306, %p307
      %p310 = scmp.ne.s32.totalorder %s293, %s309
      %p311 = scmp.eq.s32.totalorder %s44, 0
      %p312 = por %p310, %p311
      %s313 = ssub.s32 %s38, %s45
      %p314 = scmp.eq.s32.totalorder %s313, 0
      %s316 = sadd.s32 %s315, 1
      %s317 = scalar_select %p314, %s315, %s316
      %p320 = pneg %p314
      %p321 = scmp.eq.s32.totalorder %s38, 1
      %p322 = por %p320, %p321
      %p323 = scmp.ne.s32.totalorder %s315, %s318
      %p324 = scmp.eq.s32.totalorder %s38, 0
      %p325 = por %p323, %p324
      %p326 = scmp.ne.s32.totalorder %s315, %s318
      %p327 = scmp.eq.s32.totalorder %s43, 1
      %p328 = por %p326, %p327
      %p329 = scmp.ne.s32.totalorder %s318, %s319
      %p330 = scmp.eq.s32.totalorder %s43, 0
      %p331 = por %p329, %p330
      %p332 = scmp.ne.s32.totalorder %s318, %s319
      %p333 = scmp.eq.s32.totalorder %s44, 1
      %p334 = por %p332, %p333
      %p336 = scmp.ne.s32.totalorder %s319, %s335
      %p337 = scmp.eq.s32.totalorder %s44, 0
      %p338 = por %p336, %p337
      %s339 = ssub.s32 %s38, %s45
      %p340 = scmp.eq.s32.totalorder %s339, 0
      %s342 = sadd.s32 %s341, 1
      %s343 = scalar_select %p340, %s341, %s342
      %p346 = pneg %p340
      %p347 = scmp.eq.s32.totalorder %s38, 1
      %p348 = por %p346, %p347
      %p349 = scmp.ne.s32.totalorder %s341, %s344
      %p350 = scmp.eq.s32.totalorder %s38, 0
      %p351 = por %p349, %p350
      %p352 = scmp.ne.s32.totalorder %s341, %s344
      %p353 = scmp.eq.s32.totalorder %s43, 1
      %p354 = por %p352, %p353
      %p355 = scmp.ne.s32.totalorder %s344, %s345
      %p356 = scmp.eq.s32.totalorder %s43, 0
      %p357 = por %p355, %p356
      %p358 = scmp.ne.s32.totalorder %s344, %s345
      %p359 = scmp.eq.s32.totalorder %s44, 1
      %p360 = por %p358, %p359
      %p362 = scmp.ne.s32.totalorder %s345, %s361
      %p363 = scmp.eq.s32.totalorder %s44, 0
      %p364 = por %p362, %p363
      %s365 = ssub.s32 %s38, %s45
      %p366 = scmp.eq.s32.totalorder %s365, 0
      %s368 = sadd.s32 %s367, 1
      %s369 = scalar_select %p366, %s367, %s368
      %p372 = pneg %p366
      %p373 = scmp.eq.s32.totalorder %s38, 1
      %p374 = por %p372, %p373
      %p375 = scmp.ne.s32.totalorder %s367, %s370
      %p376 = scmp.eq.s32.totalorder %s38, 0
      %p377 = por %p375, %p376
      %p378 = scmp.ne.s32.totalorder %s367, %s370
      %p379 = scmp.eq.s32.totalorder %s43, 1
      %p380 = por %p378, %p379
      %p381 = scmp.ne.s32.totalorder %s370, %s371
      %p382 = scmp.eq.s32.totalorder %s43, 0
      %p383 = por %p381, %p382
      %p384 = scmp.ne.s32.totalorder %s370, %s371
      %p385 = scmp.eq.s32.totalorder %s44, 1
      %p386 = por %p384, %p385
      %p388 = scmp.ne.s32.totalorder %s371, %s387
      %p389 = scmp.eq.s32.totalorder %s44, 0
      %p390 = por %p388, %p389
      %s391 = ssub.s32 %s38, %s45
      %p392 = scmp.eq.s32.totalorder %s391, 0
      %s394 = sadd.s32 %s393, 1
      %s395 = scalar_select %p392, %s393, %s394
      %p398 = pneg %p392
      %p399 = scmp.eq.s32.totalorder %s38, 1
      %p400 = por %p398, %p399
      %p401 = scmp.ne.s32.totalorder %s393, %s396
      %p402 = scmp.eq.s32.totalorder %s38, 0
      %p403 = por %p401, %p402
      %p404 = scmp.ne.s32.totalorder %s393, %s396
      %p405 = scmp.eq.s32.totalorder %s43, 1
      %p406 = por %p404, %p405
      %p407 = scmp.ne.s32.totalorder %s396, %s397
      %p408 = scmp.eq.s32.totalorder %s43, 0
      %p409 = por %p407, %p408
      %p410 = scmp.ne.s32.totalorder %s396, %s397
      %p411 = scmp.eq.s32.totalorder %s44, 1
      %p412 = por %p410, %p411
      %p414 = scmp.ne.s32.totalorder %s397, %s413
      %p415 = scmp.eq.s32.totalorder %s44, 0
      %p416 = por %p414, %p415
      %s417 = ssub.s32 %s38, %s45
      %p418 = scmp.eq.s32.totalorder %s417, 0
      %s420 = sadd.s32 %s419, 1
      %s421 = scalar_select %p418, %s419, %s420
      %p424 = pneg %p418
      %p425 = scmp.eq.s32.totalorder %s38, 1
      %p426 = por %p424, %p425
      %p427 = scmp.ne.s32.totalorder %s419, %s422
      %p428 = scmp.eq.s32.totalorder %s38, 0
      %p429 = por %p427, %p428
      %p430 = scmp.ne.s32.totalorder %s419, %s422
      %p431 = scmp.eq.s32.totalorder %s43, 1
      %p432 = por %p430, %p431
      %p433 = scmp.ne.s32.totalorder %s422, %s423
      %p434 = scmp.eq.s32.totalorder %s43, 0
      %p435 = por %p433, %p434
      %p436 = scmp.ne.s32.totalorder %s422, %s423
      %p437 = scmp.eq.s32.totalorder %s44, 1
      %p438 = por %p436, %p437
      %p440 = scmp.ne.s32.totalorder %s423, %s439
      %p441 = scmp.eq.s32.totalorder %s44, 0
      %p442 = por %p440, %p441
      %s443 = ssub.s32 %s38, %s45
      %p444 = scmp.eq.s32.totalorder %s443, 0
      %s446 = sadd.s32 %s445, 1
      %s447 = scalar_select %p444, %s445, %s446
      %p450 = pneg %p444
      %p451 = scmp.eq.s32.totalorder %s38, 1
      %p452 = por %p450, %p451
      %p453 = scmp.ne.s32.totalorder %s445, %s448
      %p454 = scmp.eq.s32.totalorder %s38, 0
      %p455 = por %p453, %p454
      %p456 = scmp.ne.s32.totalorder %s445, %s448
      %p457 = scmp.eq.s32.totalorder %s43, 1
      %p458 = por %p456, %p457
      %p459 = scmp.ne.s32.totalorder %s448, %s449
      %p460 = scmp.eq.s32.totalorder %s43, 0
      %p461 = por %p459, %p460
      %p462 = scmp.ne.s32.totalorder %s448, %s449
      %p463 = scmp.eq.s32.totalorder %s44, 1
      %p464 = por %p462, %p463
      %p466 = scmp.ne.s32.totalorder %s449, %s465
      %p467 = scmp.eq.s32.totalorder %s44, 0
      %p468 = por %p466, %p467
      %s469 = ssub.s32 %s38, %s45
      %p470 = scmp.eq.s32.totalorder %s469, 0
      %s472 = sadd.s32 %s471, 1
      %s473 = scalar_select %p470, %s471, %s472
      %p476 = pneg %p470
      %p477 = scmp.eq.s32.totalorder %s38, 1
      %p478 = por %p476, %p477
      %p479 = scmp.ne.s32.totalorder %s471, %s474
      %p480 = scmp.eq.s32.totalorder %s38, 0
      %p481 = por %p479, %p480
      %p482 = scmp.ne.s32.totalorder %s471, %s474
      %p483 = scmp.eq.s32.totalorder %s43, 1
      %p484 = por %p482, %p483
      %p485 = scmp.ne.s32.totalorder %s474, %s475
      %p486 = scmp.eq.s32.totalorder %s43, 0
      %p487 = por %p485, %p486
      %p488 = scmp.ne.s32.totalorder %s474, %s475
      %p489 = scmp.eq.s32.totalorder %s44, 1
      %p490 = por %p488, %p489
      %p492 = scmp.ne.s32.totalorder %s475, %s491
      %p493 = scmp.eq.s32.totalorder %s44, 0
      %p494 = por %p492, %p493
      %s495 = ssub.s32 %s38, %s45
      %p496 = scmp.eq.s32.totalorder %s495, 0
      %s498 = sadd.s32 %s497, 1
      %s499 = scalar_select %p496, %s497, %s498
      %p502 = pneg %p496
      %p503 = scmp.eq.s32.totalorder %s38, 1
      %p504 = por %p502, %p503
      %p505 = scmp.ne.s32.totalorder %s497, %s500
      %p506 = scmp.eq.s32.totalorder %s38, 0
      %p507 = por %p505, %p506
      %p508 = scmp.ne.s32.totalorder %s497, %s500
      %p509 = scmp.eq.s32.totalorder %s43, 1
      %p510 = por %p508, %p509
      %p511 = scmp.ne.s32.totalorder %s500, %s501
      %p512 = scmp.eq.s32.totalorder %s43, 0
      %p513 = por %p511, %p512
      %p514 = scmp.ne.s32.totalorder %s500, %s501
      %p515 = scmp.eq.s32.totalorder %s44, 1
      %p516 = por %p514, %p515
      %p518 = scmp.ne.s32.totalorder %s501, %s517
      %p519 = scmp.eq.s32.totalorder %s44, 0
      %p520 = por %p518, %p519
      %s521 = ssub.s32 %s38, %s45
      %p522 = scmp.eq.s32.totalorder %s521, 0
      %s524 = sadd.s32 %s523, 1
      %s525 = scalar_select %p522, %s523, %s524
      %p528 = pneg %p522
      %p529 = scmp.eq.s32.totalorder %s38, 1
      %p530 = por %p528, %p529
      %p531 = scmp.ne.s32.totalorder %s523, %s526
      %p532 = scmp.eq.s32.totalorder %s38, 0
      %p533 = por %p531, %p532
      %p534 = scmp.ne.s32.totalorder %s523, %s526
      %p535 = scmp.eq.s32.totalorder %s43, 1
      %p536 = por %p534, %p535
      %p537 = scmp.ne.s32.totalorder %s526, %s527
      %p538 = scmp.eq.s32.totalorder %s43, 0
      %p539 = por %p537, %p538
      %p540 = scmp.ne.s32.totalorder %s526, %s527
      %p541 = scmp.eq.s32.totalorder %s44, 1
      %p542 = por %p540, %p541
      %p544 = scmp.ne.s32.totalorder %s527, %s543
      %p545 = scmp.eq.s32.totalorder %s44, 0
      %p546 = por %p544, %p545
      %s548 = sadd.s32 %s547, 1
      %p551 = scmp.eq.s32.totalorder %s38, 1
      %p552 = scmp.ne.s32.totalorder %s547, %s549
      %p553 = scmp.eq.s32.totalorder %s38, 0
      %p554 = por %p552, %p553
      %p555 = scmp.ne.s32.totalorder %s547, %s549
      %p556 = scmp.eq.s32.totalorder %s43, 1
      %p557 = por %p555, %p556
      %p558 = scmp.ne.s32.totalorder %s549, %s550
      %p559 = scmp.eq.s32.totalorder %s43, 0
      %p560 = por %p558, %p559
      %p561 = scmp.ne.s32.totalorder %s549, %s550
      %p562 = scmp.eq.s32.totalorder %s44, 1
      %p563 = por %p561, %p562
      %p565 = scmp.ne.s32.totalorder %s550, %s564
      %p566 = scmp.eq.s32.totalorder %s44, 0
      %p567 = por %p565, %p566
      %s569 = sadd.s32 %s568, 1
      %p572 = scmp.eq.s32.totalorder %s38, 1
      %p573 = scmp.ne.s32.totalorder %s568, %s570
      %p574 = scmp.eq.s32.totalorder %s38, 0
      %p575 = por %p573, %p574
      %p576 = scmp.ne.s32.totalorder %s568, %s570
      %p577 = scmp.eq.s32.totalorder %s43, 1
      %p578 = por %p576, %p577
      %p579 = scmp.ne.s32.totalorder %s570, %s571
      %p580 = scmp.eq.s32.totalorder %s43, 0
      %p581 = por %p579, %p580
      %p582 = scmp.ne.s32.totalorder %s570, %s571
      %p583 = scmp.eq.s32.totalorder %s44, 1
      %p584 = por %p582, %p583
      %p586 = scmp.ne.s32.totalorder %s571, %s585
      %p587 = scmp.eq.s32.totalorder %s44, 0
      %p588 = por %p586, %p587
      %s590 = sadd.s32 %s589, 1
      %p593 = scmp.eq.s32.totalorder %s38, 1
      %p594 = scmp.ne.s32.totalorder %s589, %s591
      %p595 = scmp.eq.s32.totalorder %s38, 0
      %p596 = por %p594, %p595
      %p597 = scmp.ne.s32.totalorder %s589, %s591
      %p598 = scmp.eq.s32.totalorder %s43, 1
      %p599 = por %p597, %p598
      %p600 = scmp.ne.s32.totalorder %s591, %s592
      %p601 = scmp.eq.s32.totalorder %s43, 0
      %p602 = por %p600, %p601
      %p603 = scmp.ne.s32.totalorder %s591, %s592
      %p604 = scmp.eq.s32.totalorder %s44, 1
      %p605 = por %p603, %p604
      %p607 = scmp.ne.s32.totalorder %s592, %s606
      %p608 = scmp.eq.s32.totalorder %s44, 0
      %p609 = por %p607, %p608
      %p610 = scmp.le.s32.totalorder 1, %s38
      %p611 = scmp.lt.s32.totalorder %s38, 3
      %p612 = pnand %p610, %p611
      %p613 = pneg %p612
      // Predicated region
      $region9: #{_lambda_.1} parent=5 // pred_check
        _
      $region10: #{_lambda_.1} parent=5 // pred_check_branch
        %615 = sbr.rel (%p612) target = $region12
      $region11: #{_lambda_.1} parent=5 // pred_region
        %s616 = ssub.s32 %s38, 1
        // Predicated region
        $region13: #{_lambda_.1} parent=11 // pred_check
          %p617 = pneg %p59
        $region14: #{_lambda_.1} parent=11 // pred_check_branch
          %619 = sbr.rel (%p617) target = $region16
        $region15: #{_lambda_.1} parent=11 // pred_region
          _
        $region16: #{_lambda_.1} parent=11 // pred_fallthru
          _
        // Predicated region
        $region17: #{_lambda_.1} parent=11 // pred_check
          %p620 = pneg %p80
        $region18: #{_lambda_.1} parent=11 // pred_check_branch
          %622 = sbr.rel (%p620) target = $region20
        $region19: #{_lambda_.1} parent=11 // pred_region
          _
        $region20: #{_lambda_.1} parent=11 // pred_fallthru
          _
        // Predicated region
        $region21: #{_lambda_.1} parent=11 // pred_check
          %p623 = pneg %p101
        $region22: #{_lambda_.1} parent=11 // pred_check_branch
          %625 = sbr.rel (%p623) target = $region24
        $region23: #{_lambda_.1} parent=11 // pred_region
          _
        $region24: #{_lambda_.1} parent=11 // pred_fallthru
          _
        // Predicated region
        $region25: #{_lambda_.1} parent=11 // pred_check
          %p626 = pneg %p122
        $region26: #{_lambda_.1} parent=11 // pred_check_branch
          %628 = sbr.rel (%p626) target = $region28
        $region27: #{_lambda_.1} parent=11 // pred_region
          _
        $region28: #{_lambda_.1} parent=11 // pred_fallthru
          _
        // Predicated region
        $region29: #{_lambda_.1} parent=11 // pred_check
          %p629 = pneg %p143
        $region30: #{_lambda_.1} parent=11 // pred_check_branch
          %631 = sbr.rel (%p629) target = $region32
        $region31: #{_lambda_.1} parent=11 // pred_region
          _
        $region32: #{_lambda_.1} parent=11 // pred_fallthru
          _
        // Predicated region
        $region33: #{_lambda_.1} parent=11 // pred_check
          %p632 = pneg %p164
        $region34: #{_lambda_.1} parent=11 // pred_check_branch
          %634 = sbr.rel (%p632) target = $region36
        $region35: #{_lambda_.1} parent=11 // pred_region
          _
        $region36: #{_lambda_.1} parent=11 // pred_fallthru
          _
        // Predicated region
        $region37: #{_lambda_.1} parent=11 // pred_check
          %p635 = pneg %p185
        $region38: #{_lambda_.1} parent=11 // pred_check_branch
          %637 = sbr.rel (%p635) target = $region40
        $region39: #{_lambda_.1} parent=11 // pred_region
          _
        $region40: #{_lambda_.1} parent=11 // pred_fallthru
          _
        // Predicated region
        $region41: #{_lambda_.1} parent=11 // pred_check
          %p638 = pneg %p206
        $region42: #{_lambda_.1} parent=11 // pred_check_branch
          %640 = sbr.rel (%p638) target = $region44
        $region43: #{_lambda_.1} parent=11 // pred_region
          _
        $region44: #{_lambda_.1} parent=11 // pred_fallthru
          _
        // Predicated region
        $region45: #{_lambda_.1} parent=11 // pred_check
          %p641 = pneg %p227
        $region46: #{_lambda_.1} parent=11 // pred_check_branch
          %643 = sbr.rel (%p641) target = $region48
        $region47: #{_lambda_.1} parent=11 // pred_region
          _
        $region48: #{_lambda_.1} parent=11 // pred_fallthru
          _
      $region12: #{_lambda_.1} parent=5 // pred_fallthru
        _
      %p644 = scmp.lt.s32.totalorder %s38, 2
      // Predicated region
      $region49: #{_lambda_.1} parent=5 // pred_check
        %p645 = pneg %p644
      $region50: #{_lambda_.1} parent=5 // pred_check_branch
        %647 = sbr.rel (%p645) target = $region52
      $region51: #{_lambda_.1} parent=5 // pred_region
        // Predicated region
        $region53: #{_lambda_.1} parent=51 // pred_check
          %p648 = pneg %p247
        $region54: #{_lambda_.1} parent=51 // pred_check_branch
          %650 = sbr.rel (%p648) target = $region56
        $region55: #{_lambda_.1} parent=51 // pred_region
          %s651 = sand.u32 %s237, 1
          %s652 = scalar_lea.sflag [#allocation5], %s651
          %s653 = sand.u32 %s237, 1
          %s654 = smul.addr %s653, 192
          %s655 = scalar_lea.vmem [#allocation4], %s654
          %s657 = ssub.s32 3072, 3072
          %658 = vsyncadd %s652, %s657
          %s659 = smul.addr %s38, 48
          %s660 = smul.addr %s659, 64
          %s661 = scalar_lea.hbm %s9, %s660
          %s662 = sshll.u32 %s655, 4
          %s663 = int_to_ptr.vmem [resolvable:$true] %s662
          %668 = dma.hbm_to_vmem [thread:$0]  %s661, 3072, %s663, %s652, 192, 192, 12
        $region56: #{_lambda_.1} parent=51 // pred_fallthru
          _
        // Predicated region
        $region57: #{_lambda_.1} parent=51 // pred_check
          %p669 = pneg %p273
        $region58: #{_lambda_.1} parent=51 // pred_check_branch
          %671 = sbr.rel (%p669) target = $region60
        $region59: #{_lambda_.1} parent=51 // pred_region
          %p672 = scmp.lt.s32.totalorder %s38, 1
          %s673 = scalar_select %p672, %s38, 1
          %s674 = smul.addr %s673, 3
          %s675 = scalar_lea.vmem %s10, %s674
        $region60: #{_lambda_.1} parent=51 // pred_fallthru
          _
        // Predicated region
        $region61: #{_lambda_.1} parent=51 // pred_check
          %p676 = pneg %p299
        $region62: #{_lambda_.1} parent=51 // pred_check_branch
          %678 = sbr.rel (%p676) target = $region64
        $region63: #{_lambda_.1} parent=51 // pred_region
          %s679 = sand.u32 %s38, 1
          %s680 = scalar_lea.sflag [#allocation8], %s679
          %s681 = sand.u32 %s289, 1
          %s682 = smul.addr %s681, 64
          %s683 = scalar_lea.vmem [#allocation7], %s682
          %s685 = ssub.s32 1024, 1024
          %686 = vsyncadd %s680, %s685
          %s687 = smul.addr %s38, 16
          %s688 = smul.addr %s687, 64
          %s689 = scalar_lea.hbm %s11, %s688
          %s690 = sshll.u32 %s683, 4
          %s691 = int_to_ptr.vmem [resolvable:$true] %s690
          %696 = dma.hbm_to_vmem [thread:$0]  %s689, 1024, %s691, %s680, 64, 64, 4
        $region64: #{_lambda_.1} parent=51 // pred_fallthru
          _
        // Predicated region
        $region65: #{_lambda_.1} parent=51 // pred_check
          %p697 = pneg %p325
        $region66: #{_lambda_.1} parent=51 // pred_check_branch
          %699 = sbr.rel (%p697) target = $region68
        $region67: #{_lambda_.1} parent=51 // pred_region
          %p700 = scmp.lt.s32.totalorder %s38, 1
          %s701 = scalar_select %p700, %s38, 1
          %s702 = scalar_lea.vmem %s12, %s701
        $region68: #{_lambda_.1} parent=51 // pred_fallthru
          _
        // Predicated region
        $region69: #{_lambda_.1} parent=51 // pred_check
          %p703 = pneg %p351
        $region70: #{_lambda_.1} parent=51 // pred_check_branch
          %705 = sbr.rel (%p703) target = $region72
        $region71: #{_lambda_.1} parent=51 // pred_region
          %p706 = scmp.lt.s32.totalorder %s38, 1
          %s707 = scalar_select %p706, %s38, 1
          %s708 = scalar_lea.vmem %s13, %s707
        $region72: #{_lambda_.1} parent=51 // pred_fallthru
          _
        // Predicated region
        $region73: #{_lambda_.1} parent=51 // pred_check
          %p709 = pneg %p377
        $region74: #{_lambda_.1} parent=51 // pred_check_branch
          %711 = sbr.rel (%p709) target = $region76
        $region75: #{_lambda_.1} parent=51 // pred_region
          %p712 = scmp.lt.s32.totalorder %s38, 1
          %s713 = scalar_select %p712, %s38, 1
          %s714 = scalar_lea.vmem %s14, %s713
        $region76: #{_lambda_.1} parent=51 // pred_fallthru
          _
        // Predicated region
        $region77: #{_lambda_.1} parent=51 // pred_check
          %p715 = pneg %p403
        $region78: #{_lambda_.1} parent=51 // pred_check_branch
          %717 = sbr.rel (%p715) target = $region80
        $region79: #{_lambda_.1} parent=51 // pred_region
          %p718 = scmp.lt.s32.totalorder %s38, 1
          %s719 = scalar_select %p718, %s38, 1
          %s720 = smul.addr %s719, 32
          %s721 = smul.addr %s720, 4
          %s722 = scalar_lea.vmem %s15, %s721
        $region80: #{_lambda_.1} parent=51 // pred_fallthru
          _
        // Predicated region
        $region81: #{_lambda_.1} parent=51 // pred_check
          %p723 = pneg %p429
        $region82: #{_lambda_.1} parent=51 // pred_check_branch
          %725 = sbr.rel (%p723) target = $region84
        $region83: #{_lambda_.1} parent=51 // pred_region
          %p726 = scmp.lt.s32.totalorder %s38, 1
          %s727 = scalar_select %p726, %s38, 1
          %s728 = smul.addr %s727, 2
          %s729 = scalar_lea.vmem %s16, %s728
        $region84: #{_lambda_.1} parent=51 // pred_fallthru
          _
        // Predicated region
        $region85: #{_lambda_.1} parent=51 // pred_check
          %p730 = pneg %p455
        $region86: #{_lambda_.1} parent=51 // pred_check_branch
          %732 = sbr.rel (%p730) target = $region88
        $region87: #{_lambda_.1} parent=51 // pred_region
          %s733 = sand.u32 %s38, 1
          %s734 = scalar_lea.sflag [#allocation8], %s733
          %s735 = sand.u32 %s445, 1
          %s736 = smul.addr %s735, 128
          %s737 = scalar_lea.vmem [#allocation9], %s736
          %s739 = ssub.s32 2048, 2048
          %740 = vsyncadd %s734, %s739
          %s741 = smul.addr %s38, 32
          %s742 = smul.addr %s741, 64
          %s743 = scalar_lea.hbm %s17, %s742
          %s744 = sshll.u32 %s737, 4
          %s745 = int_to_ptr.vmem [resolvable:$true] %s744
          %750 = dma.hbm_to_vmem [thread:$0]  %s743, 2048, %s745, %s734, 64, 64, 4
        $region88: #{_lambda_.1} parent=51 // pred_fallthru
          _
        // Predicated region
        $region89: #{_lambda_.1} parent=51 // pred_check
          %p751 = pneg %p481
        $region90: #{_lambda_.1} parent=51 // pred_check_branch
          %753 = sbr.rel (%p751) target = $region92
        $region91: #{_lambda_.1} parent=51 // pred_region
          %p754 = scmp.lt.s32.totalorder %s38, 1
          %s755 = scalar_select %p754, %s38, 1
          %s756 = scalar_lea.vmem %s18, %s755
        $region92: #{_lambda_.1} parent=51 // pred_fallthru
          _
        // Predicated region
        $region93: #{_lambda_.1} parent=51 // pred_check
          %p757 = pneg %p507
        $region94: #{_lambda_.1} parent=51 // pred_check_branch
          %759 = sbr.rel (%p757) target = $region96
        $region95: #{_lambda_.1} parent=51 // pred_region
          %p760 = scmp.lt.s32.totalorder %s38, 1
          %s761 = scalar_select %p760, %s38, 1
          %s762 = scalar_lea.vmem %s19, %s761
        $region96: #{_lambda_.1} parent=51 // pred_fallthru
          _
        // Predicated region
        $region97: #{_lambda_.1} parent=51 // pred_check
          %p763 = pneg %p533
        $region98: #{_lambda_.1} parent=51 // pred_check_branch
          %765 = sbr.rel (%p763) target = $region100
        $region99: #{_lambda_.1} parent=51 // pred_region
          %p766 = scmp.lt.s32.totalorder %s38, 1
          %s767 = scalar_select %p766, %s38, 1
          %s768 = scalar_lea.vmem %s20, %s767
        $region100: #{_lambda_.1} parent=51 // pred_fallthru
          _
      $region52: #{_lambda_.1} parent=5 // pred_fallthru
        _
      %p769 = scmp.le.s32.totalorder 1, %s38
      %p770 = scmp.lt.s32.totalorder %s38, 3
      %p771 = pnand %p769, %p770
      %p772 = pneg %p771
      // Predicated region
      $region101: #{_lambda_.1} parent=5 // pred_check
        _
      $region102: #{_lambda_.1} parent=5 // pred_check_branch
        %774 = sbr.rel (%p771) target = $region104
      $region103: #{_lambda_.1} parent=5 // pred_region
        %s775 = ssub.s32 %s38, 1
        %s776 = sand.u32 %s240, 1
        %s777 = scalar_lea.sflag [#allocation5], %s776
        %s778 = sand.u32 %s240, 1
        %s779 = smul.addr %s778, 192
        %s780 = scalar_lea.vmem [#allocation4], %s779
        // Predicated region
        $region105: #{_lambda_.1} parent=103 // pred_check
          %p781 = pneg %p253
        $region106: #{_lambda_.1} parent=103 // pred_check_branch
          %783 = sbr.rel (%p781) target = $region108
        $region107: #{_lambda_.1} parent=103 // pred_region
          %784 = dma.done %s777, 3072
        $region108: #{_lambda_.1} parent=103 // pred_fallthru
          _
        %s785 = sand.u32 %s43, 1
        %s786 = scalar_lea.sflag [#allocation8], %s785
        %s787 = sand.u32 %s292, 1
        %s788 = smul.addr %s787, 64
        %s789 = scalar_lea.vmem [#allocation7], %s788
        // Predicated region
        $region109: #{_lambda_.1} parent=103 // pred_check
          %p790 = pneg %p305
        $region110: #{_lambda_.1} parent=103 // pred_check_branch
          %792 = sbr.rel (%p790) target = $region112
        $region111: #{_lambda_.1} parent=103 // pred_region
          %793 = dma.done %s786, 1024
        $region112: #{_lambda_.1} parent=103 // pred_fallthru
          _
        %s794 = sand.u32 %s43, 1
        %s795 = scalar_lea.sflag [#allocation8], %s794
        %s796 = sand.u32 %s448, 1
        %s797 = smul.addr %s796, 128
        %s798 = scalar_lea.vmem [#allocation9], %s797
        // Predicated region
        $region113: #{_lambda_.1} parent=103 // pred_check
          %p799 = pneg %p461
        $region114: #{_lambda_.1} parent=103 // pred_check_branch
          %801 = sbr.rel (%p799) target = $region116
        $region115: #{_lambda_.1} parent=103 // pred_region
          %802 = dma.done %s795, 2048
        $region116: #{_lambda_.1} parent=103 // pred_fallthru
          _
        %p803 = pneg %p59
        %p804 = pneg %p56
        %p805 = pneg %p80
        %p806 = pneg %p77
        %p807 = pneg %p101
        %p808 = pneg %p98
        %p809 = pneg %p122
        %p810 = pneg %p119
        %p811 = pneg %p143
        %p812 = pneg %p140
        %p813 = pneg %p164
        %p814 = pneg %p161
        %p815 = pneg %p185
        %p816 = pneg %p182
        %p817 = pneg %p206
        %p818 = pneg %p203
        %p819 = pneg %p227
        %p820 = pneg %p224
        %s821 = sand.u32 %s240, 1
        %s822 = scalar_lea.sflag [#allocation5], %s821
        %s823 = sand.u32 %s240, 1
        %s824 = smul.addr %s823, 192
        %s825 = scalar_lea.vmem [#allocation4], %s824
        %p826 = pneg %p253
        %p827 = pneg %p250
        %p828 = scmp.lt.s32.totalorder %s43, 1
        %s829 = scalar_select %p828, %s43, 1
        %s830 = smul.addr %s829, 3
        %s831 = scalar_lea.vmem %s10, %s830
        %p832 = pneg %p279
        %p833 = pneg %p276
        %s834 = sand.u32 %s43, 1
        %s835 = scalar_lea.sflag [#allocation8], %s834
        %s836 = sand.u32 %s292, 1
        %s837 = smul.addr %s836, 64
        %s838 = scalar_lea.vmem [#allocation7], %s837
        %p839 = pneg %p305
        %p840 = pneg %p302
        %p841 = scmp.lt.s32.totalorder %s43, 1
        %s842 = scalar_select %p841, %s43, 1
        %s843 = scalar_lea.vmem %s12, %s842
        %p844 = pneg %p331
        %p845 = pneg %p328
        %p846 = scmp.lt.s32.totalorder %s43, 1
        %s847 = scalar_select %p846, %s43, 1
        %s848 = scalar_lea.vmem %s13, %s847
        %p849 = pneg %p357
        %p850 = pneg %p354
        %p851 = scmp.lt.s32.totalorder %s43, 1
        %s852 = scalar_select %p851, %s43, 1
        %s853 = scalar_lea.vmem %s14, %s852
        %p854 = pneg %p383
        %p855 = pneg %p380
        %p856 = scmp.lt.s32.totalorder %s43, 1
        %s857 = scalar_select %p856, %s43, 1
        %s858 = smul.addr %s857, 32
        %s859 = smul.addr %s858, 4
        %s860 = scalar_lea.vmem %s15, %s859
        %p861 = pneg %p409
        %p862 = pneg %p406
        %p863 = scmp.lt.s32.totalorder %s43, 1
        %s864 = scalar_select %p863, %s43, 1
        %s865 = smul.addr %s864, 2
        %s866 = scalar_lea.vmem %s16, %s865
        %p867 = pneg %p435
        %p868 = pneg %p432
        %s869 = sand.u32 %s43, 1
        %s870 = scalar_lea.sflag [#allocation8], %s869
        %s871 = sand.u32 %s448, 1
        %s872 = smul.addr %s871, 128
        %s873 = scalar_lea.vmem [#allocation9], %s872
        %p874 = pneg %p461
        %p875 = pneg %p458
        %p876 = scmp.lt.s32.totalorder %s43, 1
        %s877 = scalar_select %p876, %s43, 1
        %s878 = scalar_lea.vmem %s18, %s877
        %p879 = pneg %p487
        %p880 = pneg %p484
        %p881 = scmp.lt.s32.totalorder %s43, 1
        %s882 = scalar_select %p881, %s43, 1
        %s883 = scalar_lea.vmem %s19, %s882
        %p884 = pneg %p513
        %p885 = pneg %p510
        %p886 = scmp.lt.s32.totalorder %s43, 1
        %s887 = scalar_select %p886, %s43, 1
        %s888 = scalar_lea.vmem %s20, %s887
        %p889 = pneg %p539
        %p890 = pneg %p536
        %p891 = pneg %p560
        %p892 = pneg %p557
        %p893 = pneg %p581
        %p894 = pneg %p578
        %p895 = pneg %p602
        %p896 = pneg %p599
        %p897 = scmp.lt.s32.totalorder %s43, 1
        %s898 = scalar_select %p897, %s43, 1
        %s899 = smul.addr %s898, 3
        %s900 = scalar_lea.vmem %s10, %s899
        %p901 = scmp.lt.s32.totalorder %s43, 1
        %s902 = scalar_select %p901, %s43, 1
        %s903 = scalar_lea.vmem %s12, %s902
        %p904 = scmp.lt.s32.totalorder %s43, 1
        %s905 = scalar_select %p904, %s43, 1
        %s906 = scalar_lea.vmem %s13, %s905
        %p907 = scmp.lt.s32.totalorder %s43, 1
        %s908 = scalar_select %p907, %s43, 1
        %s909 = scalar_lea.vmem %s14, %s908
        %p910 = scmp.lt.s32.totalorder %s43, 1
        %s911 = scalar_select %p910, %s43, 1
        %s912 = smul.addr %s911, 32
        %s913 = smul.addr %s912, 4
        %s914 = scalar_lea.vmem %s15, %s913
        %p915 = scmp.lt.s32.totalorder %s43, 1
        %s916 = scalar_select %p915, %s43, 1
        %s917 = smul.addr %s916, 2
        %s918 = scalar_lea.vmem %s16, %s917
        %p919 = scmp.lt.s32.totalorder %s43, 1
        %s920 = scalar_select %p919, %s43, 1
        %s921 = scalar_lea.vmem %s18, %s920
        %p922 = scmp.lt.s32.totalorder %s43, 1
        %s923 = scalar_select %p922, %s43, 1
        %s924 = scalar_lea.vmem %s19, %s923
        %p925 = scmp.lt.s32.totalorder %s43, 1
        %s926 = scalar_select %p925, %s43, 1
        %s927 = scalar_lea.vmem %s20, %s926
        %p929 = scmp.eq.s32.totalorder %s43, 0
        // Predicated region
        $region117: #{_lambda_.1} parent=103 // pred_check
          %p930 = pneg %p929
        $region118: #{_lambda_.1} parent=103 // pred_check_branch
          %932 = sbr.rel (%p930) target = $region120
        $region119: #{_lambda_.1} parent=103 // pred_region
          %v933 = vld [vmem:[%s5] sm:$0xff]
          %v934 = vld [vmem:[%s5 + $0x8] sm:$0xff]
          %v935 = vld [vmem:[%s6] sm:$0xff]
          %v936 = vld [vmem:[%s6 + $0x8] sm:$0xff]
          %v937 = vadd.f32 %v933, %v935
          %v938 = vadd.f32 %v934, %v936
          %v939 = vld [vmem:[%s7] sm:$0x1]
          %v940 = vld [vmem:[%s8] sm:$0x1]
          %941 = vadd.xlane.f32.xlu0 %v937
          %v942 = vpop.xlane.xlu0 %941
          %943 = vadd.xlane.f32.xlu0 %v938
          %v944 = vpop.xlane.xlu0 %943
          %v945 = vrcp.pop 128.0
          %v946 = vmul.f32 %v942, %v945
          %v947 = vmul.f32 %v944, %v945
          %v948 = vsub.f32 %v937, %v946
          %v949 = vsub.f32 %v938, %v947
          %v950 = vmul.f32 %v948, %v948
          %v951 = vmul.f32 %v949, %v949
          %952 = vadd.xlane.f32.xlu0 %v950
          %v953 = vpop.xlane.xlu0 %952
          %954 = vadd.xlane.f32.xlu0 %v951
          %v955 = vpop.xlane.xlu0 %954
          %v956 = vmul.f32 %v953, %v945
          %v957 = vmul.f32 %v955, %v945
          %v958 = vadd.f32 %v956, 1e-12
          %v959 = vadd.f32 %v957, 1e-12
          %v960 = vrsqrt.pop %v958
          %v961 = vrsqrt.pop %v959
          %v962 = vmul.f32 %v948, %v960
          %v963 = vmul.f32 %v949, %v961
          %v965 = vlaneseq
          %v966 = vshrl.u32 %v965, 7
          %v967 = vsub.s32 0, %v966
          %v968 = vrot.slane %v939, %v967
          %v970 = vmul.f32 %v962, %v968
          %v971 = vmul.f32 %v963, %v968
          %v973 = vlaneseq
          %v974 = vshrl.u32 %v973, 7
          %v975 = vsub.s32 0, %v974
          %v976 = vrot.slane %v940, %v975
          %v978 = vadd.f32 %v970, %v976
          %v979 = vadd.f32 %v971, %v976
          %980 = vst [vmem:[#allocation2] sm:$0xff] %v978
          %981 = vst [vmem:[#allocation2 + $0x8] sm:$0xff] %v979
          %982 = vst [vmem:[#allocation3] sm:$0xff] 0.0
          %983 = vst [vmem:[#allocation3 + $0x8] sm:$0xff] 0.0
        $region120: #{_lambda_.1} parent=103 // pred_fallthru
          _
        %v984 = vld [vmem:[#allocation2] sm:$0xff]
        %v985 = vld [vmem:[#allocation2 + $0x8] sm:$0xff]
        %v986 = vld [vmem:[%s2] sm:$0xff]
        %v987 = vld [vmem:[%s2 + $0x8] sm:$0xff]
        %v988 = vld [vmem:[%s2 + $0x10] sm:$0xff]
        %v989 = vld [vmem:[%s2 + $0x18] sm:$0xff]
        %v990 = vpack.c.bf16 %v985, %v984
        %v991 = vld [vmem:[%s780] sm:$0xff]
        %v992 = vld [vmem:[%s780 + $0x8] sm:$0xf]
        %v993 = vld [vmem:[%s780 + $0xc] sm:$0xff]
        %v994 = vld [vmem:[%s780 + $0x14] sm:$0xf]
        %v995 = vld [vmem:[%s780 + $0x18] sm:$0xff]
        %v996 = vld [vmem:[%s780 + $0x20] sm:$0xf]
        %v997 = vld [vmem:[%s780 + $0x24] sm:$0xff]
        %v998 = vld [vmem:[%s780 + $0x2c] sm:$0xf]
        %v999 = vld [vmem:[%s780 + $0x30] sm:$0xff]
        %v1000 = vld [vmem:[%s780 + $0x38] sm:$0xf]
        %v1001 = vld [vmem:[%s780 + $0x3c] sm:$0xff]
        %v1002 = vld [vmem:[%s780 + $0x44] sm:$0xf]
        %v1003 = vld [vmem:[%s780 + $0x48] sm:$0xff]
        %v1004 = vld [vmem:[%s780 + $0x50] sm:$0xf]
        %v1005 = vld [vmem:[%s780 + $0x54] sm:$0xff]
        %v1006 = vld [vmem:[%s780 + $0x5c] sm:$0xf]
        %v1007 = vld [vmem:[%s780 + $0x60] sm:$0xff]
        %v1008 = vld [vmem:[%s780 + $0x68] sm:$0xf]
        %v1009 = vld [vmem:[%s780 + $0x6c] sm:$0xff]
        %v1010 = vld [vmem:[%s780 + $0x74] sm:$0xf]
        %v1011 = vld [vmem:[%s780 + $0x78] sm:$0xff]
        %v1012 = vld [vmem:[%s780 + $0x80] sm:$0xf]
        %v1013 = vld [vmem:[%s780 + $0x84] sm:$0xff]
        %v1014 = vld [vmem:[%s780 + $0x8c] sm:$0xf]
        %v1015 = vld [vmem:[%s780 + $0x90] sm:$0xff]
        %v1016 = vld [vmem:[%s780 + $0x98] sm:$0xf]
        %v1017 = vld [vmem:[%s780 + $0x9c] sm:$0xff]
        %v1018 = vld [vmem:[%s780 + $0xa4] sm:$0xf]
        %v1019 = vld [vmem:[%s780 + $0xa8] sm:$0xff]
        %v1020 = vld [vmem:[%s780 + $0xb0] sm:$0xf]
        %v1021 = vld [vmem:[%s780 + $0xb4] sm:$0xff]
        %v1022 = vld [vmem:[%s780 + $0xbc] sm:$0xf]
        %v1023 = vld [vmem:[%s900] sm:$0x7]
        %v1025 = vlaneseq
        %v1026 = vshrl.u32 %v1025, 7
        %v1027 = vsub.s32 0, %v1026
        %v1028 = vrot.slane %v1023, %v1027
        %v1029 = vlaneseq
        %v1030 = vshrl.u32 %v1029, 7
        %v1031 = vsub.s32 1, %v1030
        %v1032 = vrot.slane %v1023, %v1031
        %v1033 = vlaneseq
        %v1034 = vshrl.u32 %v1033, 7
        %v1035 = vsub.s32 2, %v1034
        %v1036 = vrot.slane %v1023, %v1035
        %v1072 = vunpack.c.l.b16 %v991
        %v1073 = vunpack.c.h.b16 %v991
        %v1074 = vunpack.c.l.b16 %v992
        %v1075 = vunpack.c.l.b16 %v993
        %v1076 = vunpack.c.h.b16 %v993
        %v1077 = vunpack.c.l.b16 %v994
        %v1078 = vunpack.c.l.b16 %v995
        %v1079 = vunpack.c.h.b16 %v995
        %v1080 = vunpack.c.l.b16 %v996
        %v1081 = vunpack.c.l.b16 %v997
        %v1082 = vunpack.c.h.b16 %v997
        %v1083 = vunpack.c.l.b16 %v998
        %v1084 = vunpack.c.l.b16 %v999
        %v1085 = vunpack.c.h.b16 %v999
        %v1086 = vunpack.c.l.b16 %v1000
        %v1087 = vunpack.c.l.b16 %v1001
        %v1088 = vunpack.c.h.b16 %v1001
        %v1089 = vunpack.c.l.b16 %v1002
        %v1090 = vunpack.c.l.b16 %v1003
        %v1091 = vunpack.c.h.b16 %v1003
        %v1092 = vunpack.c.l.b16 %v1004
        %v1093 = vunpack.c.l.b16 %v1005
        %v1094 = vunpack.c.h.b16 %v1005
        %v1095 = vunpack.c.l.b16 %v1006
        %v1096 = vunpack.c.l.b16 %v1007
        %v1097 = vunpack.c.h.b16 %v1007
        %v1098 = vunpack.c.l.b16 %v1008
        %v1099 = vunpack.c.l.b16 %v1009
        %v1100 = vunpack.c.h.b16 %v1009
        %v1101 = vunpack.c.l.b16 %v1010
        %v1102 = vunpack.c.l.b16 %v1011
        %v1103 = vunpack.c.h.b16 %v1011
        %v1104 = vunpack.c.l.b16 %v1012
        %v1105 = vunpack.c.l.b16 %v1013
        %v1106 = vunpack.c.h.b16 %v1013
        %v1107 = vunpack.c.l.b16 %v1014
        %v1108 = vunpack.c.l.b16 %v1015
        %v1109 = vunpack.c.h.b16 %v1015
        %v1110 = vunpack.c.l.b16 %v1016
        %v1111 = vunpack.c.l.b16 %v1017
        %v1112 = vunpack.c.h.b16 %v1017
        %v1113 = vunpack.c.l.b16 %v1018
        %v1114 = vunpack.c.l.b16 %v1019
        %v1115 = vunpack.c.h.b16 %v1019
        %v1116 = vunpack.c.l.b16 %v1020
        %v1117 = vunpack.c.l.b16 %v1021
        %v1118 = vunpack.c.h.b16 %v1021
        %v1119 = vunpack.c.l.b16 %v1022
        %v1120 = vpack.c.b16 %v1075, %v1072
        %v1121 = vpack.c.b16 %v1076, %v1073
        %v1122 = vpack.c.b16 %v1077, %v1074
        %v1123 = vpack.c.b16 %v1081, %v1078
        %v1124 = vpack.c.b16 %v1082, %v1079
        %v1125 = vpack.c.b16 %v1083, %v1080
        %v1126 = vpack.c.b16 %v1087, %v1084
        %v1127 = vpack.c.b16 %v1088, %v1085
        %v1128 = vpack.c.b16 %v1089, %v1086
        %v1129 = vpack.c.b16 %v1093, %v1090
        %v1130 = vpack.c.b16 %v1094, %v1091
        %v1131 = vpack.c.b16 %v1095, %v1092
        %v1132 = vpack.c.b16 %v1099, %v1096
        %v1133 = vpack.c.b16 %v1100, %v1097
        %v1134 = vpack.c.b16 %v1101, %v1098
        %v1135 = vpack.c.b16 %v1105, %v1102
        %v1136 = vpack.c.b16 %v1106, %v1103
        %v1137 = vpack.c.b16 %v1107, %v1104
        %v1138 = vpack.c.b16 %v1111, %v1108
        %v1139 = vpack.c.b16 %v1112, %v1109
        %v1140 = vpack.c.b16 %v1113, %v1110
        %v1141 = vpack.c.b16 %v1117, %v1114
        %v1142 = vpack.c.b16 %v1118, %v1115
        %v1143 = vpack.c.b16 %v1119, %v1116
        %1168 = vmatprep.subr.bf16.mxu0 %v1142
        %1169 = vmatpush1.bf16.msra.mxu0 %v1141
        %1170 = vmatprep.subr.bf16.mxu0 %v1139
        %1171 = vmatpush1.bf16.msra.mxu0 %v1138
        %1172 = vmatprep.subr.bf16.mxu0 %v1136
        %1173 = vmatpush1.bf16.msra.mxu0 %v1135
        %1174 = vmatprep.subr.bf16.mxu0 %v1133
        %1175 = vmatpush1.bf16.msra.mxu0 %v1132
        %1176 = vmatprep.subr.bf16.mxu0 %v1130
        %1177 = vmatpush1.bf16.msra.mxu0 %v1129
        %1178 = vmatprep.subr.bf16.mxu0 %v1127
        %1179 = vmatpush1.bf16.msra.mxu0 %v1126
        %1180 = vmatprep.subr.bf16.mxu0 %v1124
        %1181 = vmatpush1.bf16.msra.mxu0 %v1123
        %1182 = vmatprep.subr.bf16.mxu0 %v1121
        %1183 = vmatpush1.bf16.msra.mxu0 %v1120
        %1184 = vmatprep.subr.bf16.mxu0 0
        %1185 = vmatpush2.bf16.msra.mxu0 0
        %1186 = vmatprep.subr.bf16.mxu0 0
        %1187 = vmatpush2.bf16.msra.mxu0 0
        %1188 = vmatprep.subr.bf16.mxu0 0
        %1189 = vmatpush2.bf16.msra.mxu0 0
        %1190 = vmatprep.subr.bf16.mxu0 0
        %1191 = vmatpush2.bf16.msra.mxu0 0
        %1192 = vmatprep.subr.bf16.mxu0 0
        %1193 = vmatpush2.bf16.msra.mxu0 0
        %1194 = vmatprep.subr.bf16.mxu0 0
        %1195 = vmatpush2.bf16.msra.mxu0 0
        %1196 = vmatprep.subr.bf16.mxu0 0
        %1197 = vmatpush2.bf16.msra.mxu0 0
        %1198 = vmatprep.subr.bf16.mxu0 0
        %1199 = vmatpush2.bf16.msra.mxu0 0
        %1200 = vmatprep.mubr.bf16.mxu0 0
        %1201 = vmatmul.mubr.bf16.gmra.mxu0 %v990
        %v1202 = vpop.f32.mrf.mxu0
        %v1203 = vadd.f32 %v1028, %v1202
        %v1204 = vpop.f32.mrf.mxu0
        %v1205 = vadd.f32 %v1032, %v1204
        %v1206 = vpop.f32.mrf.mxu0
        %v1207 = vadd.f32 %v1028, %v1206
        %v1208 = vpop.f32.mrf.mxu0
        %v1209 = vadd.f32 %v1032, %v1208
        %1210 = vdwg.mxu0
        %1211 = vmatprep.subr.bf16.mxu0 0
        %1212 = vmatpush1.bf16.msra.mxu0 %v1143
        %1213 = vmatprep.subr.bf16.mxu0 0
        %1214 = vmatpush1.bf16.msra.mxu0 %v1140
        %1215 = vmatprep.subr.bf16.mxu0 0
        %1216 = vmatpush1.bf16.msra.mxu0 %v1137
        %1217 = vmatprep.subr.bf16.mxu0 0
        %1218 = vmatpush1.bf16.msra.mxu0 %v1134
        %1219 = vmatprep.subr.bf16.mxu0 0
        %1220 = vmatpush1.bf16.msra.mxu0 %v1131
        %1221 = vmatprep.subr.bf16.mxu0 0
        %1222 = vmatpush1.bf16.msra.mxu0 %v1128
        %1223 = vmatprep.subr.bf16.mxu0 0
        %1224 = vmatpush1.bf16.msra.mxu0 %v1125
        %1225 = vmatprep.subr.bf16.mxu0 0
        %1226 = vmatpush1.bf16.msra.mxu0 %v1122
        %1227 = vmatprep.subr.bf16.mxu0 0
        %1228 = vmatpush2.bf16.msra.mxu0 0
        %1229 = vmatprep.subr.bf16.mxu0 0
        %1230 = vmatpush2.bf16.msra.mxu0 0
        %1231 = vmatprep.subr.bf16.mxu0 0
        %1232 = vmatpush2.bf16.msra.mxu0 0
        %1233 = vmatprep.subr.bf16.mxu0 0
        %1234 = vmatpush2.bf16.msra.mxu0 0
        %1235 = vmatprep.subr.bf16.mxu0 0
        %1236 = vmatpush2.bf16.msra.mxu0 0
        %1237 = vmatprep.subr.bf16.mxu0 0
        %1238 = vmatpush2.bf16.msra.mxu0 0
        %1239 = vmatprep.subr.bf16.mxu0 0
        %1240 = vmatpush2.bf16.msra.mxu0 0
        %1241 = vmatprep.subr.bf16.mxu0 0
        %1242 = vmatpush2.bf16.msra.mxu0 0
        %1243 = vmatprep.mubr.bf16.mxu0 0
        %1244 = vmatmul.mubr.bf16.gmra.mxu0 %v990
        %v1245 = vpop.f32.mrf.mxu0
        %v1246 = vadd.f32 %v1036, %v1245
        %v1247 = vpop.f32.mrf.mxu0
        %v1248 = vpop.f32.mrf.mxu0
        %v1249 = vadd.f32 %v1036, %v1248
        %v1250 = vpop.f32.mrf.mxu0
        %1251 = vdwg.mxu0
        %v1252 = vmul.f32 %v1203, 0.17677669
        %v1253 = vmul.f32 %v1207, 0.17677669
        %v1254 = vpack.c.bf16 %v1252, %v1252
        %v1255 = vpack.c.bf16 %v1253, %v1253
        %v1256 = vmul.f32 %v1205, %v986
        %v1257 = vmul.f32 %v1205, %v987
        %v1258 = vmul.f32 %v1205, %v988
        %v1259 = vmul.f32 %v1205, %v989
        %v1260 = vmul.f32 %v1209, %v986
        %v1261 = vmul.f32 %v1209, %v987
        %v1262 = vmul.f32 %v1209, %v988
        %v1263 = vmul.f32 %v1209, %v989
        %v1264 = vpack.c.bf16 %v1257, %v1256
        %v1265 = vpack.c.bf16 %v1259, %v1258
        %v1266 = vpack.c.bf16 %v1261, %v1260
        %v1267 = vpack.c.bf16 %v1263, %v1262
        %v1268 = vmul.f32 %v1246, %v986
        %v1269 = vmul.f32 %v1246, %v987
        %v1270 = vmul.f32 %v1246, %v988
        %v1271 = vmul.f32 %v1246, %v989
        %v1272 = vmul.f32 %v1249, %v986
        %v1273 = vmul.f32 %v1249, %v987
        %v1274 = vmul.f32 %v1249, %v988
        %v1275 = vmul.f32 %v1249, %v989
        %v1276 = vpack.c.bf16 %v1269, %v1268
        %v1277 = vpack.c.bf16 %v1271, %v1270
        %v1278 = vpack.c.bf16 %v1273, %v1272
        %v1279 = vpack.c.bf16 %v1275, %v1274
        %v1280 = vld [vmem:[%s0] sm:$0xff]
        %v1281 = vld [vmem:[%s0 + $0x8] sm:$0xff]
        %1282 = vmatprep.subr.bf16.mxu0 0
        %1283 = vmatpush1.bf16.xpose.msra.mxu0 0
        %1284 = vmatprep.subr.bf16.mxu0 0
        %1285 = vmatpush1.bf16.xpose.msra.mxu0 0
        %1286 = vmatprep.subr.bf16.mxu0 0
        %1287 = vmatpush1.bf16.xpose.msra.mxu0 0
        %1288 = vmatprep.subr.bf16.mxu0 0
        %1289 = vmatpush1.bf16.xpose.msra.mxu0 0
        %1290 = vmatprep.subr.bf16.mxu0 0
        %1291 = vmatpush1.bf16.xpose.msra.mxu0 0
        %1292 = vmatprep.subr.bf16.mxu0 0
        %1293 = vmatpush1.bf16.xpose.msra.mxu0 0
        %1294 = vmatprep.subr.bf16.mxu0 0
        %1295 = vmatpush1.bf16.xpose.msra.mxu0 %v1265
        %1296 = vmatprep.subr.bf16.mxu0 0
        %1297 = vmatpush1.bf16.xpose.msra.mxu0 %v1264
        %1298 = vmatprep.subr.bf16.mxu0 0
        %1299 = vmatpush2.bf16.xpose.msra.mxu0 0
        %1300 = vmatprep.subr.bf16.mxu0 0
        %1301 = vmatpush2.bf16.xpose.msra.mxu0 0
        %1302 = vmatprep.subr.bf16.mxu0 0
        %1303 = vmatpush2.bf16.xpose.msra.mxu0 0
        %1304 = vmatprep.subr.bf16.mxu0 0
        %1305 = vmatpush2.bf16.xpose.msra.mxu0 0
        %1306 = vmatprep.subr.bf16.mxu0 0
        %1307 = vmatpush2.bf16.xpose.msra.mxu0 0
        %1308 = vmatprep.subr.bf16.mxu0 0
        %1309 = vmatpush2.bf16.xpose.msra.mxu0 0
        %1310 = vmatprep.subr.bf16.mxu0 0
        %1311 = vmatpush2.bf16.xpose.msra.mxu0 0
        %1312 = vmatprep.subr.bf16.mxu0 0
        %1313 = vmatpush2.bf16.xpose.msra.mxu0 0
        %1314 = vmatprep.mubr.bf16.mxu0 0
        %1315 = vmatmul.mubr.bf16.gmra.mxu0 %v1254
        %v1316 = vpop.f32.mrf.mxu0
        %v1317 = vadd.f32 %v1280, %v1316
        %v1318 = vpop.f32.mrf.mxu0
        %v1319 = vpop.f32.mrf.mxu0
        %v1320 = vpop.f32.mrf.mxu0
        %1321 = vdwg.mxu0
        %1322 = vmatprep.subr.bf16.mxu0 0
        %1323 = vmatpush1.bf16.xpose.msra.mxu0 0
        %1324 = vmatprep.subr.bf16.mxu0 0
        %1325 = vmatpush1.bf16.xpose.msra.mxu0 0
        %1326 = vmatprep.subr.bf16.mxu0 0
        %1327 = vmatpush1.bf16.xpose.msra.mxu0 0
        %1328 = vmatprep.subr.bf16.mxu0 0
        %1329 = vmatpush1.bf16.xpose.msra.mxu0 0
        %1330 = vmatprep.subr.bf16.mxu0 0
        %1331 = vmatpush1.bf16.xpose.msra.mxu0 0
        %1332 = vmatprep.subr.bf16.mxu0 0
        %1333 = vmatpush1.bf16.xpose.msra.mxu0 0
        %1334 = vmatprep.subr.bf16.mxu0 0
        %1335 = vmatpush1.bf16.xpose.msra.mxu0 %v1267
        %1336 = vmatprep.subr.bf16.mxu0 0
        %1337 = vmatpush1.bf16.xpose.msra.mxu0 %v1266
        %1338 = vmatprep.subr.bf16.mxu0 0
        %1339 = vmatpush2.bf16.xpose.msra.mxu0 0
        %1340 = vmatprep.subr.bf16.mxu0 0
        %1341 = vmatpush2.bf16.xpose.msra.mxu0 0
        %1342 = vmatprep.subr.bf16.mxu0 0
        %1343 = vmatpush2.bf16.xpose.msra.mxu0 0
        %1344 = vmatprep.subr.bf16.mxu0 0
        %1345 = vmatpush2.bf16.xpose.msra.mxu0 0
        %1346 = vmatprep.subr.bf16.mxu0 0
        %1347 = vmatpush2.bf16.xpose.msra.mxu0 0
        %1348 = vmatprep.subr.bf16.mxu0 0
        %1349 = vmatpush2.bf16.xpose.msra.mxu0 0
        %1350 = vmatprep.subr.bf16.mxu0 0
        %1351 = vmatpush2.bf16.xpose.msra.mxu0 0
        %1352 = vmatprep.subr.bf16.mxu0 0
        %1353 = vmatpush2.bf16.xpose.msra.mxu0 0
        %1354 = vmatprep.mubr.bf16.mxu0 0
        %1355 = vmatmul.mubr.bf16.gmra.mxu0 %v1255
        %v1356 = vpop.f32.mrf.mxu0
        %v1357 = vadd.f32 %v1281, %v1356
        %v1358 = vpop.f32.mrf.mxu0
        %v1359 = vpop.f32.mrf.mxu0
        %v1360 = vpop.f32.mrf.mxu0
        %1361 = vdwg.mxu0
        %vm1362 = vcmask 261120
        %v1363 = vsel %vm1362, %v1317, -inf
        %1364 = vmax.xlane.f32.xlu0 %v1363
        %v1365 = vpop.xlane.xlu0 %1364
        %v1366 = vsel %vm1362, %v1357, -inf
        %1367 = vmax.xlane.f32.xlu0 %v1366
        %v1368 = vpop.xlane.xlu0 %1367
        %v1369 = vsub.f32 %v1317, %v1365
        %v1370 = vsub.f32 %v1357, %v1368
        %v1371 = vmul.f32 %v1369, 1.442695
        %v1372 = vpow.pop %v1371
        %v1373 = vmul.f32 %v1370, 1.442695
        %v1374 = vpow.pop %v1373
        %v1376 = vsel %vm1362, %v1372, 0
        %v1379 = vsel %vm1362, %v1374, 0
        %1381 = vmatprep.subr.mxu0 0.0
        %1382 = vmatpush1.msra.mxu0 0.0
        %1383 = vmatprep.subr.mxu0 0.0
        %1384 = vmatpush1.msra.mxu0 0.0
        %1385 = vmatprep.subr.mxu0 0.0
        %1386 = vmatpush1.msra.mxu0 0.0
        %1387 = vmatprep.subr.mxu0 0.0
        %1388 = vmatpush1.msra.mxu0 0.0
        %1389 = vmatprep.subr.mxu0 0.0
        %1390 = vmatpush1.msra.mxu0 0.0
        %1391 = vmatprep.subr.mxu0 0.0
        %1392 = vmatpush1.msra.mxu0 0.0
        %1393 = vmatprep.subr.mxu0 0.0
        %1394 = vmatpush1.msra.mxu0 0.0
        %1395 = vmatprep.subr.mxu0 0.0
        %1396 = vmatpush1.msra.mxu0 0.0
        %1397 = vmatprep.subr.mxu0 0.0
        %1398 = vmatpush1.msra.mxu0 0.0
        %1399 = vmatprep.subr.mxu0 0.0
        %1400 = vmatpush1.msra.mxu0 0.0
        %1401 = vmatprep.subr.mxu0 0.0
        %1402 = vmatpush1.msra.mxu0 0.0
        %1403 = vmatprep.subr.mxu0 0.0
        %1404 = vmatpush1.msra.mxu0 0.0
        %1405 = vmatprep.subr.mxu0 0.0
        %1406 = vmatpush1.msra.mxu0 %v989
        %1407 = vmatprep.subr.mxu0 0.0
        %1408 = vmatpush1.msra.mxu0 %v988
        %1409 = vmatprep.subr.mxu0 0.0
        %1410 = vmatpush1.msra.mxu0 %v987
        %1411 = vmatprep.subr.mxu0 0.0
        %1412 = vmatpush1.msra.mxu0 %v986
        %1413 = vmatprep.subr.mxu0 0.0
        %1414 = vmatpush2.msra.mxu0 0.0
        %1415 = vmatprep.subr.mxu0 0.0
        %1416 = vmatpush2.msra.mxu0 0.0
        %1417 = vmatprep.subr.mxu0 0.0
        %1418 = vmatpush2.msra.mxu0 0.0
        %1419 = vmatprep.subr.mxu0 0.0
        %1420 = vmatpush2.msra.mxu0 0.0
        %1421 = vmatprep.subr.mxu0 0.0
        %1422 = vmatpush2.msra.mxu0 0.0
        %1423 = vmatprep.subr.mxu0 0.0
        %1424 = vmatpush2.msra.mxu0 0.0
        %1425 = vmatprep.subr.mxu0 0.0
        %1426 = vmatpush2.msra.mxu0 0.0
        %1427 = vmatprep.subr.mxu0 0.0
        %1428 = vmatpush2.msra.mxu0 0.0
        %1429 = vmatprep.subr.mxu0 0.0
        %1430 = vmatpush2.msra.mxu0 0.0
        %1431 = vmatprep.subr.mxu0 0.0
        %1432 = vmatpush2.msra.mxu0 0.0
        %1433 = vmatprep.subr.mxu0 0.0
        %1434 = vmatpush2.msra.mxu0 0.0
        %1435 = vmatprep.subr.mxu0 0.0
        %1436 = vmatpush2.msra.mxu0 0.0
        %1437 = vmatprep.subr.mxu0 0.0
        %1438 = vmatpush2.msra.mxu0 0.0
        %1439 = vmatprep.subr.mxu0 0.0
        %1440 = vmatpush2.msra.mxu0 0.0
        %1441 = vmatprep.subr.mxu0 0.0
        %1442 = vmatpush2.msra.mxu0 0.0
        %1443 = vmatprep.subr.mxu0 0.0
        %1444 = vmatpush2.msra.mxu0 0.0
        %1445 = vmatprep.mubr.f32.mxu0 0.0
        %1446 = vmatmul.mubr.f32.gmra.mxu0 %v1376
        %v1447 = vpop.f32.mrf.mxu0
        %v1448 = vadd.f32 0.0, %v1447
        %v1449 = vpop.f32.mrf.mxu0
        %1450 = vmatprep.mubr.f32.mxu0 0.0
        %1451 = vmatmul.mubr.f32.gmra.mxu0 %v1379
        %v1452 = vpop.f32.mrf.mxu0
        %v1453 = vadd.f32 0.0, %v1452
        %v1454 = vpop.f32.mrf.mxu0
        %1455 = vdwg.mxu0
        %v1456 = vpack.c.bf16 %v1372, %v1372
        %v1457 = vpack.c.bf16 %v1374, %v1374
        %v1459 = vsel %vm1362, %v1456, 0
        %1461 = vmatprep.subr.bf16.mxu0 0
        %1462 = vmatpush1.bf16.msra.mxu0 0
        %1463 = vmatprep.subr.bf16.mxu0 0
        %1464 = vmatpush1.bf16.msra.mxu0 0
        %1465 = vmatprep.subr.bf16.mxu0 0
        %1466 = vmatpush1.bf16.msra.mxu0 0
        %1467 = vmatprep.subr.bf16.mxu0 0
        %1468 = vmatpush1.bf16.msra.mxu0 0
        %1469 = vmatprep.subr.bf16.mxu0 0
        %1470 = vmatpush1.bf16.msra.mxu0 0
        %1471 = vmatprep.subr.bf16.mxu0 0
        %1472 = vmatpush1.bf16.msra.mxu0 0
        %1473 = vmatprep.subr.bf16.mxu0 0
        %1474 = vmatpush1.bf16.msra.mxu0 %v1277
        %1475 = vmatprep.subr.bf16.mxu0 0
        %1476 = vmatpush1.bf16.msra.mxu0 %v1276
        %1477 = vmatprep.subr.bf16.mxu0 0
        %1478 = vmatpush2.bf16.msra.mxu0 0
        %1479 = vmatprep.subr.bf16.mxu0 0
        %1480 = vmatpush2.bf16.msra.mxu0 0
        %1481 = vmatprep.subr.bf16.mxu0 0
        %1482 = vmatpush2.bf16.msra.mxu0 0
        %1483 = vmatprep.subr.bf16.mxu0 0
        %1484 = vmatpush2.bf16.msra.mxu0 0
        %1485 = vmatprep.subr.bf16.mxu0 0
        %1486 = vmatpush2.bf16.msra.mxu0 0
        %1487 = vmatprep.subr.bf16.mxu0 0
        %1488 = vmatpush2.bf16.msra.mxu0 0
        %1489 = vmatprep.subr.bf16.mxu0 0
        %1490 = vmatpush2.bf16.msra.mxu0 0
        %1491 = vmatprep.subr.bf16.mxu0 0
        %1492 = vmatpush2.bf16.msra.mxu0 0
        %1493 = vmatprep.mubr.bf16.mxu0 0
        %1494 = vmatmul.mubr.bf16.gmra.mxu0 %v1459
        %v1495 = vpop.f32.mrf.mxu0
        %v1496 = vadd.f32 0.0, %v1495
        %v1497 = vpop.f32.mrf.mxu0
        %v1498 = vpop.f32.mrf.mxu0
        %v1499 = vpop.f32.mrf.mxu0
        %1500 = vdwg.mxu0
        %v1502 = vsel %vm1362, %v1457, 0
        %1504 = vmatprep.subr.bf16.mxu0 0
        %1505 = vmatpush1.bf16.msra.mxu0 0
        %1506 = vmatprep.subr.bf16.mxu0 0
        %1507 = vmatpush1.bf16.msra.mxu0 0
        %1508 = vmatprep.subr.bf16.mxu0 0
        %1509 = vmatpush1.bf16.msra.mxu0 0
        %1510 = vmatprep.subr.bf16.mxu0 0
        %1511 = vmatpush1.bf16.msra.mxu0 0
        %1512 = vmatprep.subr.bf16.mxu0 0
        %1513 = vmatpush1.bf16.msra.mxu0 0
        %1514 = vmatprep.subr.bf16.mxu0 0
        %1515 = vmatpush1.bf16.msra.mxu0 0
        %1516 = vmatprep.subr.bf16.mxu0 0
        %1517 = vmatpush1.bf16.msra.mxu0 %v1279
        %1518 = vmatprep.subr.bf16.mxu0 0
        %1519 = vmatpush1.bf16.msra.mxu0 %v1278
        %1520 = vmatprep.subr.bf16.mxu0 0
        %1521 = vmatpush2.bf16.msra.mxu0 0
        %1522 = vmatprep.subr.bf16.mxu0 0
        %1523 = vmatpush2.bf16.msra.mxu0 0
        %1524 = vmatprep.subr.bf16.mxu0 0
        %1525 = vmatpush2.bf16.msra.mxu0 0
        %1526 = vmatprep.subr.bf16.mxu0 0
        %1527 = vmatpush2.bf16.msra.mxu0 0
        %1528 = vmatprep.subr.bf16.mxu0 0
        %1529 = vmatpush2.bf16.msra.mxu0 0
        %1530 = vmatprep.subr.bf16.mxu0 0
        %1531 = vmatpush2.bf16.msra.mxu0 0
        %1532 = vmatprep.subr.bf16.mxu0 0
        %1533 = vmatpush2.bf16.msra.mxu0 0
        %1534 = vmatprep.subr.bf16.mxu0 0
        %1535 = vmatpush2.bf16.msra.mxu0 0
        %1536 = vmatprep.mubr.bf16.mxu0 0
        %1537 = vmatmul.mubr.bf16.gmra.mxu0 %v1502
        %v1538 = vpop.f32.mrf.mxu0
        %v1539 = vadd.f32 0.0, %v1538
        %v1540 = vpop.f32.mrf.mxu0
        %v1541 = vpop.f32.mrf.mxu0
        %v1542 = vpop.f32.mrf.mxu0
        %1543 = vdwg.mxu0
        %v1544 = vrcp.pop %v1448
        %v1545 = vmul.f32 %v1496, %v1544
        %v1546 = vrcp.pop %v1453
        %v1547 = vmul.f32 %v1539, %v1546
        %v1548 = vpack.c.bf16 %v1547, %v1545
        %v1549 = vld [vmem:[%s789] sm:$0xf]
        %v1550 = vld [vmem:[%s789 + $0x4] sm:$0xf]
        %v1551 = vld [vmem:[%s789 + $0x8] sm:$0xf]
        %v1552 = vld [vmem:[%s789 + $0xc] sm:$0xf]
        %v1553 = vld [vmem:[%s789 + $0x10] sm:$0xf]
        %v1554 = vld [vmem:[%s789 + $0x14] sm:$0xf]
        %v1555 = vld [vmem:[%s789 + $0x18] sm:$0xf]
        %v1556 = vld [vmem:[%s789 + $0x1c] sm:$0xf]
        %v1557 = vld [vmem:[%s789 + $0x20] sm:$0xf]
        %v1558 = vld [vmem:[%s789 + $0x24] sm:$0xf]
        %v1559 = vld [vmem:[%s789 + $0x28] sm:$0xf]
        %v1560 = vld [vmem:[%s789 + $0x2c] sm:$0xf]
        %v1561 = vld [vmem:[%s789 + $0x30] sm:$0xf]
        %v1562 = vld [vmem:[%s789 + $0x34] sm:$0xf]
        %v1563 = vld [vmem:[%s789 + $0x38] sm:$0xf]
        %v1564 = vld [vmem:[%s789 + $0x3c] sm:$0xf]
        %v1565 = vld [vmem:[%s903] sm:$0x1]
        %v1567 = vlaneseq
        %v1568 = vshrl.u32 %v1567, 7
        %v1569 = vsub.s32 0, %v1568
        %v1570 = vrot.slane %v1565, %v1569
        %v1588 = vunpack.c.l.b16 %v1549
        %v1589 = vunpack.c.l.b16 %v1550
        %v1590 = vunpack.c.l.b16 %v1551
        %v1591 = vunpack.c.l.b16 %v1552
        %v1592 = vunpack.c.l.b16 %v1553
        %v1593 = vunpack.c.l.b16 %v1554
        %v1594 = vunpack.c.l.b16 %v1555
        %v1595 = vunpack.c.l.b16 %v1556
        %v1596 = vunpack.c.l.b16 %v1557
        %v1597 = vunpack.c.l.b16 %v1558
        %v1598 = vunpack.c.l.b16 %v1559
        %v1599 = vunpack.c.l.b16 %v1560
        %v1600 = vunpack.c.l.b16 %v1561
        %v1601 = vunpack.c.l.b16 %v1562
        %v1602 = vunpack.c.l.b16 %v1563
        %v1603 = vunpack.c.l.b16 %v1564
        %v1604 = vpack.c.b16 %v1589, %v1588
        %v1605 = vpack.c.b16 %v1591, %v1590
        %v1606 = vpack.c.b16 %v1593, %v1592
        %v1607 = vpack.c.b16 %v1595, %v1594
        %v1608 = vpack.c.b16 %v1597, %v1596
        %v1609 = vpack.c.b16 %v1599, %v1598
        %v1610 = vpack.c.b16 %v1601, %v1600
        %v1611 = vpack.c.b16 %v1603, %v1602
        %1620 = vmatprep.subr.bf16.mxu0 0
        %1621 = vmatpush1.bf16.msra.mxu0 %v1611
        %1622 = vmatprep.subr.bf16.mxu0 0
        %1623 = vmatpush1.bf16.msra.mxu0 %v1610
        %1624 = vmatprep.subr.bf16.mxu0 0
        %1625 = vmatpush1.bf16.msra.mxu0 %v1609
        %1626 = vmatprep.subr.bf16.mxu0 0
        %1627 = vmatpush1.bf16.msra.mxu0 %v1608
        %1628 = vmatprep.subr.bf16.mxu0 0
        %1629 = vmatpush1.bf16.msra.mxu0 %v1607
        %1630 = vmatprep.subr.bf16.mxu0 0
        %1631 = vmatpush1.bf16.msra.mxu0 %v1606
        %1632 = vmatprep.subr.bf16.mxu0 0
        %1633 = vmatpush1.bf16.msra.mxu0 %v1605
        %1634 = vmatprep.subr.bf16.mxu0 0
        %1635 = vmatpush1.bf16.msra.mxu0 %v1604
        %1636 = vmatprep.subr.bf16.mxu0 0
        %1637 = vmatpush2.bf16.msra.mxu0 0
        %1638 = vmatprep.subr.bf16.mxu0 0
        %1639 = vmatpush2.bf16.msra.mxu0 0
        %1640 = vmatprep.subr.bf16.mxu0 0
        %1641 = vmatpush2.bf16.msra.mxu0 0
        %1642 = vmatprep.subr.bf16.mxu0 0
        %1643 = vmatpush2.bf16.msra.mxu0 0
        %1644 = vmatprep.subr.bf16.mxu0 0
        %1645 = vmatpush2.bf16.msra.mxu0 0
        %1646 = vmatprep.subr.bf16.mxu0 0
        %1647 = vmatpush2.bf16.msra.mxu0 0
        %1648 = vmatprep.subr.bf16.mxu0 0
        %1649 = vmatpush2.bf16.msra.mxu0 0
        %1650 = vmatprep.subr.bf16.mxu0 0
        %1651 = vmatpush2.bf16.msra.mxu0 0
        %1652 = vmatprep.mubr.bf16.mxu0 0
        %1653 = vmatmul.mubr.bf16.gmra.mxu0 %v1548
        %v1654 = vpop.f32.mrf.mxu0
        %v1655 = vadd.f32 %v1570, %v1654
        %v1656 = vpop.f32.mrf.mxu0
        %v1657 = vpop.f32.mrf.mxu0
        %v1658 = vadd.f32 %v1570, %v1657
        %v1659 = vpop.f32.mrf.mxu0
        %1660 = vdwg.mxu0
        %v1661 = vadd.f32 %v1655, %v984
        %v1662 = vadd.f32 %v1658, %v985
        %v1663 = vld [vmem:[%s906] sm:$0x1]
        %v1664 = vld [vmem:[%s909] sm:$0x1]
        %1665 = vadd.xlane.f32.xlu0 %v1661
        %v1666 = vpop.xlane.xlu0 %1665
        %1667 = vadd.xlane.f32.xlu0 %v1662
        %v1668 = vpop.xlane.xlu0 %1667
        %v1669 = vrcp.pop 128.0
        %v1670 = vmul.f32 %v1666, %v1669
        %v1671 = vmul.f32 %v1668, %v1669
        %v1672 = vsub.f32 %v1661, %v1670
        %v1673 = vsub.f32 %v1662, %v1671
        %v1674 = vmul.f32 %v1672, %v1672
        %v1675 = vmul.f32 %v1673, %v1673
        %1676 = vadd.xlane.f32.xlu0 %v1674
        %v1677 = vpop.xlane.xlu0 %1676
        %1678 = vadd.xlane.f32.xlu0 %v1675
        %v1679 = vpop.xlane.xlu0 %1678
        %v1680 = vmul.f32 %v1677, %v1669
        %v1681 = vmul.f32 %v1679, %v1669
        %v1682 = vadd.f32 %v1680, 1e-12
        %v1683 = vadd.f32 %v1681, 1e-12
        %v1684 = vrsqrt.pop %v1682
        %v1685 = vrsqrt.pop %v1683
        %v1686 = vmul.f32 %v1672, %v1684
        %v1687 = vmul.f32 %v1673, %v1685
        %v1689 = vlaneseq
        %v1690 = vshrl.u32 %v1689, 7
        %v1691 = vsub.s32 0, %v1690
        %v1692 = vrot.slane %v1663, %v1691
        %v1694 = vmul.f32 %v1686, %v1692
        %v1695 = vmul.f32 %v1687, %v1692
        %v1697 = vlaneseq
        %v1698 = vshrl.u32 %v1697, 7
        %v1699 = vsub.s32 0, %v1698
        %v1700 = vrot.slane %v1664, %v1699
        %v1702 = vadd.f32 %v1694, %v1700
        %v1703 = vadd.f32 %v1695, %v1700
        %v1704 = vpack.c.bf16 %v1703, %v1702
        %v1705 = vld [vmem:[%s914] sm:$0xff]
        %v1706 = vld [vmem:[%s914 + $0x8] sm:$0xff]
        %v1707 = vld [vmem:[%s914 + $0x10] sm:$0xff]
        %v1708 = vld [vmem:[%s914 + $0x18] sm:$0xff]
        %v1709 = vld [vmem:[%s914 + $0x20] sm:$0xff]
        %v1710 = vld [vmem:[%s914 + $0x28] sm:$0xff]
        %v1711 = vld [vmem:[%s914 + $0x30] sm:$0xff]
        %v1712 = vld [vmem:[%s914 + $0x38] sm:$0xff]
        %v1713 = vld [vmem:[%s914 + $0x40] sm:$0xff]
        %v1714 = vld [vmem:[%s914 + $0x48] sm:$0xff]
        %v1715 = vld [vmem:[%s914 + $0x50] sm:$0xff]
        %v1716 = vld [vmem:[%s914 + $0x58] sm:$0xff]
        %v1717 = vld [vmem:[%s914 + $0x60] sm:$0xff]
        %v1718 = vld [vmem:[%s914 + $0x68] sm:$0xff]
        %v1719 = vld [vmem:[%s914 + $0x70] sm:$0xff]
        %v1720 = vld [vmem:[%s914 + $0x78] sm:$0xff]
        %v1721 = vld [vmem:[%s918] sm:$0x3]
        %v1723 = vlaneseq
        %v1724 = vshrl.u32 %v1723, 7
        %v1725 = vsub.s32 0, %v1724
        %v1726 = vrot.slane %v1721, %v1725
        %v1727 = vlaneseq
        %v1728 = vshrl.u32 %v1727, 7
        %v1729 = vsub.s32 1, %v1728
        %v1730 = vrot.slane %v1721, %v1729
        %v1749 = vunpack.c.l.b16 %v1705
        %v1750 = vunpack.c.h.b16 %v1705
        %v1751 = vunpack.c.l.b16 %v1706
        %v1752 = vunpack.c.h.b16 %v1706
        %v1753 = vunpack.c.l.b16 %v1707
        %v1754 = vunpack.c.h.b16 %v1707
        %v1755 = vunpack.c.l.b16 %v1708
        %v1756 = vunpack.c.h.b16 %v1708
        %v1757 = vunpack.c.l.b16 %v1709
        %v1758 = vunpack.c.h.b16 %v1709
        %v1759 = vunpack.c.l.b16 %v1710
        %v1760 = vunpack.c.h.b16 %v1710
        %v1761 = vunpack.c.l.b16 %v1711
        %v1762 = vunpack.c.h.b16 %v1711
        %v1763 = vunpack.c.l.b16 %v1712
        %v1764 = vunpack.c.h.b16 %v1712
        %v1765 = vunpack.c.l.b16 %v1713
        %v1766 = vunpack.c.h.b16 %v1713
        %v1767 = vunpack.c.l.b16 %v1714
        %v1768 = vunpack.c.h.b16 %v1714
        %v1769 = vunpack.c.l.b16 %v1715
        %v1770 = vunpack.c.h.b16 %v1715
        %v1771 = vunpack.c.l.b16 %v1716
        %v1772 = vunpack.c.h.b16 %v1716
        %v1773 = vunpack.c.l.b16 %v1717
        %v1774 = vunpack.c.h.b16 %v1717
        %v1775 = vunpack.c.l.b16 %v1718
        %v1776 = vunpack.c.h.b16 %v1718
        %v1777 = vunpack.c.l.b16 %v1719
        %v1778 = vunpack.c.h.b16 %v1719
        %v1779 = vunpack.c.l.b16 %v1720
        %v1780 = vunpack.c.h.b16 %v1720
        %v1781 = vpack.c.b16 %v1751, %v1749
        %v1782 = vpack.c.b16 %v1752, %v1750
        %v1783 = vpack.c.b16 %v1755, %v1753
        %v1784 = vpack.c.b16 %v1756, %v1754
        %v1785 = vpack.c.b16 %v1759, %v1757
        %v1786 = vpack.c.b16 %v1760, %v1758
        %v1787 = vpack.c.b16 %v1763, %v1761
        %v1788 = vpack.c.b16 %v1764, %v1762
        %v1789 = vpack.c.b16 %v1767, %v1765
        %v1790 = vpack.c.b16 %v1768, %v1766
        %v1791 = vpack.c.b16 %v1771, %v1769
        %v1792 = vpack.c.b16 %v1772, %v1770
        %v1793 = vpack.c.b16 %v1775, %v1773
        %v1794 = vpack.c.b16 %v1776, %v1774
        %v1795 = vpack.c.b16 %v1779, %v1777
        %v1796 = vpack.c.b16 %v1780, %v1778
        %1813 = vmatprep.subr.bf16.mxu0 %v1796
        %1814 = vmatpush1.bf16.msra.mxu0 %v1795
        %1815 = vmatprep.subr.bf16.mxu0 %v1794
        %1816 = vmatpush1.bf16.msra.mxu0 %v1793
        %1817 = vmatprep.subr.bf16.mxu0 %v1792
        %1818 = vmatpush1.bf16.msra.mxu0 %v1791
        %1819 = vmatprep.subr.bf16.mxu0 %v1790
        %1820 = vmatpush1.bf16.msra.mxu0 %v1789
        %1821 = vmatprep.subr.bf16.mxu0 %v1788
        %1822 = vmatpush1.bf16.msra.mxu0 %v1787
        %1823 = vmatprep.subr.bf16.mxu0 %v1786
        %1824 = vmatpush1.bf16.msra.mxu0 %v1785
        %1825 = vmatprep.subr.bf16.mxu0 %v1784
        %1826 = vmatpush1.bf16.msra.mxu0 %v1783
        %1827 = vmatprep.subr.bf16.mxu0 %v1782
        %1828 = vmatpush1.bf16.msra.mxu0 %v1781
        %1829 = vmatprep.subr.bf16.mxu0 0
        %1830 = vmatpush2.bf16.msra.mxu0 0
        %1831 = vmatprep.subr.bf16.mxu0 0
        %1832 = vmatpush2.bf16.msra.mxu0 0
        %1833 = vmatprep.subr.bf16.mxu0 0
        %1834 = vmatpush2.bf16.msra.mxu0 0
        %1835 = vmatprep.subr.bf16.mxu0 0
        %1836 = vmatpush2.bf16.msra.mxu0 0
        %1837 = vmatprep.subr.bf16.mxu0 0
        %1838 = vmatpush2.bf16.msra.mxu0 0
        %1839 = vmatprep.subr.bf16.mxu0 0
        %1840 = vmatpush2.bf16.msra.mxu0 0
        %1841 = vmatprep.subr.bf16.mxu0 0
        %1842 = vmatpush2.bf16.msra.mxu0 0
        %1843 = vmatprep.subr.bf16.mxu0 0
        %1844 = vmatpush2.bf16.msra.mxu0 0
        %1845 = vmatprep.mubr.bf16.mxu0 0
        %1846 = vmatmul.mubr.bf16.gmra.mxu0 %v1704
        %v1847 = vpop.f32.mrf.mxu0
        %v1848 = vadd.f32 %v1726, %v1847
        %v1849 = vpop.f32.mrf.mxu0
        %v1850 = vadd.f32 %v1730, %v1849
        %v1851 = vpop.f32.mrf.mxu0
        %v1852 = vadd.f32 %v1726, %v1851
        %v1853 = vpop.f32.mrf.mxu0
        %v1854 = vadd.f32 %v1730, %v1853
        %1855 = vdwg.mxu0
        %v1856 = vmul.f32 %v1848, %v1848
        %v1857 = vmul.f32 %v1850, %v1850
        %v1858 = vmul.f32 %v1852, %v1852
        %v1859 = vmul.f32 %v1854, %v1854
        %v1860 = vmul.f32 %v1848, %v1856
        %v1861 = vmul.f32 %v1850, %v1857
        %v1862 = vmul.f32 %v1852, %v1858
        %v1863 = vmul.f32 %v1854, %v1859
        %v1864 = vmul.f32 %v1860, 0.044715
        %v1865 = vmul.f32 %v1861, 0.044715
        %v1866 = vmul.f32 %v1862, 0.044715
        %v1867 = vmul.f32 %v1863, 0.044715
        %v1868 = vadd.f32 %v1848, %v1864
        %v1869 = vadd.f32 %v1850, %v1865
        %v1870 = vadd.f32 %v1852, %v1866
        %v1871 = vadd.f32 %v1854, %v1867
        %v1872 = vmul.f32 %v1868, 0.7978846
        %v1873 = vmul.f32 %v1869, 0.7978846
        %v1874 = vmul.f32 %v1870, 0.7978846
        %v1875 = vmul.f32 %v1871, 0.7978846
        %v1876 = vtanh.pop %v1872
        %v1877 = vtanh.pop %v1873
        %v1878 = vtanh.pop %v1874
        %v1879 = vtanh.pop %v1875
        %v1880 = vadd.f32 %v1876, 1.0
        %v1881 = vadd.f32 %v1877, 1.0
        %v1882 = vadd.f32 %v1878, 1.0
        %v1883 = vadd.f32 %v1879, 1.0
        %v1884 = vmul.f32 %v1880, 0.5
        %v1885 = vmul.f32 %v1881, 0.5
        %v1886 = vmul.f32 %v1882, 0.5
        %v1887 = vmul.f32 %v1883, 0.5
        %v1888 = vmul.f32 %v1848, %v1884
        %v1889 = vmul.f32 %v1850, %v1885
        %v1890 = vmul.f32 %v1852, %v1886
        %v1891 = vmul.f32 %v1854, %v1887
        %v1892 = vpack.c.bf16 %v1890, %v1888
        %v1893 = vpack.c.bf16 %v1891, %v1889
        %v1894 = vld [vmem:[%s798] sm:$0xf]
        %v1895 = vld [vmem:[%s798 + $0x4] sm:$0xf]
        %v1896 = vld [vmem:[%s798 + $0x8] sm:$0xf]
        %v1897 = vld [vmem:[%s798 + $0xc] sm:$0xf]
        %v1898 = vld [vmem:[%s798 + $0x10] sm:$0xf]
        %v1899 = vld [vmem:[%s798 + $0x14] sm:$0xf]
        %v1900 = vld [vmem:[%s798 + $0x18] sm:$0xf]
        %v1901 = vld [vmem:[%s798 + $0x1c] sm:$0xf]
        %v1902 = vld [vmem:[%s798 + $0x20] sm:$0xf]
        %v1903 = vld [vmem:[%s798 + $0x24] sm:$0xf]
        %v1904 = vld [vmem:[%s798 + $0x28] sm:$0xf]
        %v1905 = vld [vmem:[%s798 + $0x2c] sm:$0xf]
        %v1906 = vld [vmem:[%s798 + $0x30] sm:$0xf]
        %v1907 = vld [vmem:[%s798 + $0x34] sm:$0xf]
        %v1908 = vld [vmem:[%s798 + $0x38] sm:$0xf]
        %v1909 = vld [vmem:[%s798 + $0x3c] sm:$0xf]
        %v1910 = vld [vmem:[%s798 + $0x40] sm:$0xf]
        %v1911 = vld [vmem:[%s798 + $0x44] sm:$0xf]
        %v1912 = vld [vmem:[%s798 + $0x48] sm:$0xf]
        %v1913 = vld [vmem:[%s798 + $0x4c] sm:$0xf]
        %v1914 = vld [vmem:[%s798 + $0x50] sm:$0xf]
        %v1915 = vld [vmem:[%s798 + $0x54] sm:$0xf]
        %v1916 = vld [vmem:[%s798 + $0x58] sm:$0xf]
        %v1917 = vld [vmem:[%s798 + $0x5c] sm:$0xf]
        %v1918 = vld [vmem:[%s798 + $0x60] sm:$0xf]
        %v1919 = vld [vmem:[%s798 + $0x64] sm:$0xf]
        %v1920 = vld [vmem:[%s798 + $0x68] sm:$0xf]
        %v1921 = vld [vmem:[%s798 + $0x6c] sm:$0xf]
        %v1922 = vld [vmem:[%s798 + $0x70] sm:$0xf]
        %v1923 = vld [vmem:[%s798 + $0x74] sm:$0xf]
        %v1924 = vld [vmem:[%s798 + $0x78] sm:$0xf]
        %v1925 = vld [vmem:[%s798 + $0x7c] sm:$0xf]
        %v1926 = vld [vmem:[%s921] sm:$0x1]
        %v1928 = vlaneseq
        %v1929 = vshrl.u32 %v1928, 7
        %v1930 = vsub.s32 0, %v1929
        %v1931 = vrot.slane %v1926, %v1930
        %v1965 = vunpack.c.l.b16 %v1894
        %v1966 = vunpack.c.l.b16 %v1895
        %v1967 = vunpack.c.l.b16 %v1896
        %v1968 = vunpack.c.l.b16 %v1897
        %v1969 = vunpack.c.l.b16 %v1898
        %v1970 = vunpack.c.l.b16 %v1899
        %v1971 = vunpack.c.l.b16 %v1900
        %v1972 = vunpack.c.l.b16 %v1901
        %v1973 = vunpack.c.l.b16 %v1902
        %v1974 = vunpack.c.l.b16 %v1903
        %v1975 = vunpack.c.l.b16 %v1904
        %v1976 = vunpack.c.l.b16 %v1905
        %v1977 = vunpack.c.l.b16 %v1906
        %v1978 = vunpack.c.l.b16 %v1907
        %v1979 = vunpack.c.l.b16 %v1908
        %v1980 = vunpack.c.l.b16 %v1909
        %v1981 = vunpack.c.l.b16 %v1910
        %v1982 = vunpack.c.l.b16 %v1911
        %v1983 = vunpack.c.l.b16 %v1912
        %v1984 = vunpack.c.l.b16 %v1913
        %v1985 = vunpack.c.l.b16 %v1914
        %v1986 = vunpack.c.l.b16 %v1915
        %v1987 = vunpack.c.l.b16 %v1916
        %v1988 = vunpack.c.l.b16 %v1917
        %v1989 = vunpack.c.l.b16 %v1918
        %v1990 = vunpack.c.l.b16 %v1919
        %v1991 = vunpack.c.l.b16 %v1920
        %v1992 = vunpack.c.l.b16 %v1921
        %v1993 = vunpack.c.l.b16 %v1922
        %v1994 = vunpack.c.l.b16 %v1923
        %v1995 = vunpack.c.l.b16 %v1924
        %v1996 = vunpack.c.l.b16 %v1925
        %v1997 = vpack.c.b16 %v1966, %v1965
        %v1998 = vpack.c.b16 %v1968, %v1967
        %v1999 = vpack.c.b16 %v1970, %v1969
        %v2000 = vpack.c.b16 %v1972, %v1971
        %v2001 = vpack.c.b16 %v1974, %v1973
        %v2002 = vpack.c.b16 %v1976, %v1975
        %v2003 = vpack.c.b16 %v1978, %v1977
        %v2004 = vpack.c.b16 %v1980, %v1979
        %v2005 = vpack.c.b16 %v1982, %v1981
        %v2006 = vpack.c.b16 %v1984, %v1983
        %v2007 = vpack.c.b16 %v1986, %v1985
        %v2008 = vpack.c.b16 %v1988, %v1987
        %v2009 = vpack.c.b16 %v1990, %v1989
        %v2010 = vpack.c.b16 %v1992, %v1991
        %v2011 = vpack.c.b16 %v1994, %v1993
        %v2012 = vpack.c.b16 %v1996, %v1995
        %2029 = vmatprep.subr.bf16.mxu0 0
        %2030 = vmatpush1.bf16.msra.mxu0 %v2004
        %2031 = vmatprep.subr.bf16.mxu0 0
        %2032 = vmatpush1.bf16.msra.mxu0 %v2003
        %2033 = vmatprep.subr.bf16.mxu0 0
        %2034 = vmatpush1.bf16.msra.mxu0 %v2002
        %2035 = vmatprep.subr.bf16.mxu0 0
        %2036 = vmatpush1.bf16.msra.mxu0 %v2001
        %2037 = vmatprep.subr.bf16.mxu0 0
        %2038 = vmatpush1.bf16.msra.mxu0 %v2000
        %2039 = vmatprep.subr.bf16.mxu0 0
        %2040 = vmatpush1.bf16.msra.mxu0 %v1999
        %2041 = vmatprep.subr.bf16.mxu0 0
        %2042 = vmatpush1.bf16.msra.mxu0 %v1998
        %2043 = vmatprep.subr.bf16.mxu0 0
        %2044 = vmatpush1.bf16.msra.mxu0 %v1997
        %2045 = vmatprep.subr.bf16.mxu0 0
        %2046 = vmatpush2.bf16.msra.mxu0 %v2012
        %2047 = vmatprep.subr.bf16.mxu0 0
        %2048 = vmatpush2.bf16.msra.mxu0 %v2011
        %2049 = vmatprep.subr.bf16.mxu0 0
        %2050 = vmatpush2.bf16.msra.mxu0 %v2010
        %2051 = vmatprep.subr.bf16.mxu0 0
        %2052 = vmatpush2.bf16.msra.mxu0 %v2009
        %2053 = vmatprep.subr.bf16.mxu0 0
        %2054 = vmatpush2.bf16.msra.mxu0 %v2008
        %2055 = vmatprep.subr.bf16.mxu0 0
        %2056 = vmatpush2.bf16.msra.mxu0 %v2007
        %2057 = vmatprep.subr.bf16.mxu0 0
        %2058 = vmatpush2.bf16.msra.mxu0 %v2006
        %2059 = vmatprep.subr.bf16.mxu0 0
        %2060 = vmatpush2.bf16.msra.mxu0 %v2005
        %2061 = vmatprep.mubr.bf16.mxu0 %v1893
        %2062 = vmatmul.mubr.bf16.gmra.mxu0 %v1892
        %v2063 = vpop.f32.mrf.mxu0
        %v2064 = vadd.f32 %v1931, %v2063
        %v2065 = vpop.f32.mrf.mxu0
        %v2066 = vpop.f32.mrf.mxu0
        %v2067 = vadd.f32 %v1931, %v2066
        %v2068 = vpop.f32.mrf.mxu0
        %2069 = vdwg.mxu0
        %v2070 = vadd.f32 %v2064, %v1702
        %v2071 = vadd.f32 %v2067, %v1703
        %v2072 = vld [vmem:[%s924] sm:$0x1]
        %v2073 = vld [vmem:[%s927] sm:$0x1]
        %2074 = vadd.xlane.f32.xlu0 %v2070
        %v2075 = vpop.xlane.xlu0 %2074
        %2076 = vadd.xlane.f32.xlu0 %v2071
        %v2077 = vpop.xlane.xlu0 %2076
        %v2078 = vmul.f32 %v2075, %v1669
        %v2079 = vmul.f32 %v2077, %v1669
        %v2080 = vsub.f32 %v2070, %v2078
        %v2081 = vsub.f32 %v2071, %v2079
        %v2082 = vmul.f32 %v2080, %v2080
        %v2083 = vmul.f32 %v2081, %v2081
        %2084 = vadd.xlane.f32.xlu0 %v2082
        %v2085 = vpop.xlane.xlu0 %2084
        %2086 = vadd.xlane.f32.xlu0 %v2083
        %v2087 = vpop.xlane.xlu0 %2086
        %v2088 = vmul.f32 %v2085, %v1669
        %v2089 = vmul.f32 %v2087, %v1669
        %v2090 = vadd.f32 %v2088, 1e-12
        %v2091 = vadd.f32 %v2089, 1e-12
        %v2092 = vrsqrt.pop %v2090
        %v2093 = vrsqrt.pop %v2091
        %v2094 = vmul.f32 %v2080, %v2092
        %v2095 = vmul.f32 %v2081, %v2093
        %v2097 = vlaneseq
        %v2098 = vshrl.u32 %v2097, 7
        %v2099 = vsub.s32 0, %v2098
        %v2100 = vrot.slane %v2072, %v2099
        %v2102 = vmul.f32 %v2094, %v2100
        %v2103 = vmul.f32 %v2095, %v2100
        %v2105 = vlaneseq
        %v2106 = vshrl.u32 %v2105, 7
        %v2107 = vsub.s32 0, %v2106
        %v2108 = vrot.slane %v2073, %v2107
        %v2110 = vadd.f32 %v2102, %v2108
        %v2111 = vadd.f32 %v2103, %v2108
        %2112 = vst [vmem:[#allocation2] sm:$0xff] %v2110
        %2113 = vst [vmem:[#allocation2 + $0x8] sm:$0xff] %v2111
        %p2114 = scmp.ge.s32.totalorder %s43, 0
        // Predicated region
        $region121: #{_lambda_.1} parent=103 // pred_check
          %p2115 = pneg %p2114
        $region122: #{_lambda_.1} parent=103 // pred_check_branch
          %2117 = sbr.rel (%p2115) target = $region124
        $region123: #{_lambda_.1} parent=103 // pred_region
          %v2118 = vld [vmem:[#allocation3] sm:$0xff]
          %v2119 = vld [vmem:[#allocation3 + $0x8] sm:$0xff]
          %v2120 = vadd.f32 %v2118, %v2110
          %v2121 = vadd.f32 %v2119, %v2111
          %2122 = vst [vmem:[#allocation3] sm:$0xff] %v2120
          %2123 = vst [vmem:[#allocation3 + $0x8] sm:$0xff] %v2121
        $region124: #{_lambda_.1} parent=103 // pred_fallthru
          _
        %p2124 = scmp.eq.s32.totalorder %s43, 1
        // Predicated region
        $region125: #{_lambda_.1} parent=103 // pred_check
          %p2125 = pneg %p2124
        $region126: #{_lambda_.1} parent=103 // pred_check_branch
          %2127 = sbr.rel (%p2125) target = $region128
        $region127: #{_lambda_.1} parent=103 // pred_region
          %2128 = vst [vmem:[#allocation10] sm:$0xff] %v2110
          %2129 = vst [vmem:[#allocation10 + $0x8] sm:$0xff] %v2111
          %v2130 = vld [vmem:[#allocation3] sm:$0xff]
          %v2131 = vld [vmem:[#allocation3 + $0x8] sm:$0xff]
          %v2132 = vmul.f32 %v2130, 0.25
          %v2133 = vmul.f32 %v2131, 0.25
          %v2134 = vld [vmem:[%s1] sm:$0xff]
          %v2135 = vld [vmem:[%s1 + $0x8] sm:$0xff]
          %2137 = vset.pattern.permute.xlu0 0
          %2138 = vperm.xlu0 %2137, %v2134
          %v2139 = vpop.permute.xlu0 %2138
          %2142 = vset.pattern.permute.xlu0 0
          %2143 = vperm.xlu0 %2142, %v2135
          %v2144 = vpop.permute.xlu0 %2143
          %v2146 = vmul.f32 %v2132, %v2139
          %v2147 = vmul.f32 %v2133, %v2144
          %2148 = vst [vmem:[#allocation11] sm:$0xff] %v2146
          %2149 = vst [vmem:[#allocation11 + $0x8] sm:$0xff] %v2147
          %v2150 = vld [vmem:[%s3] sm:$0x3]
          %vm2151 = vcmask 130048
          %v2153 = vsel %vm2151, %v2150, 0
          %2155 = vmatprep.subr.mxu0 0.0
          %2156 = vmatpush1.msra.mxu0 0.0
          %2157 = vmatprep.subr.mxu0 0.0
          %2158 = vmatpush1.msra.mxu0 0.0
          %2159 = vmatprep.subr.mxu0 0.0
          %2160 = vmatpush1.msra.mxu0 0.0
          %2161 = vmatprep.subr.mxu0 0.0
          %2162 = vmatpush1.msra.mxu0 0.0
          %2163 = vmatprep.subr.mxu0 0.0
          %2164 = vmatpush1.msra.mxu0 0.0
          %2165 = vmatprep.subr.mxu0 0.0
          %2166 = vmatpush1.msra.mxu0 0.0
          %2167 = vmatprep.subr.mxu0 0.0
          %2168 = vmatpush1.msra.mxu0 0.0
          %2169 = vmatprep.subr.mxu0 0.0
          %2170 = vmatpush1.msra.mxu0 0.0
          %2171 = vmatprep.subr.mxu0 0.0
          %2172 = vmatpush1.msra.mxu0 0.0
          %2173 = vmatprep.subr.mxu0 0.0
          %2174 = vmatpush1.msra.mxu0 0.0
          %2175 = vmatprep.subr.mxu0 0.0
          %2176 = vmatpush1.msra.mxu0 0.0
          %2177 = vmatprep.subr.mxu0 0.0
          %2178 = vmatpush1.msra.mxu0 0.0
          %2179 = vmatprep.subr.mxu0 0.0
          %2180 = vmatpush1.msra.mxu0 0.0
          %2181 = vmatprep.subr.mxu0 0.0
          %2182 = vmatpush1.msra.mxu0 0.0
          %2183 = vmatprep.subr.mxu0 0.0
          %2184 = vmatpush1.msra.mxu0 %v2147
          %2185 = vmatprep.subr.mxu0 0.0
          %2186 = vmatpush1.msra.mxu0 %v2146
          %2187 = vmatprep.subr.mxu0 0.0
          %2188 = vmatpush2.msra.mxu0 0.0
          %2189 = vmatprep.subr.mxu0 0.0
          %2190 = vmatpush2.msra.mxu0 0.0
          %2191 = vmatprep.subr.mxu0 0.0
          %2192 = vmatpush2.msra.mxu0 0.0
          %2193 = vmatprep.subr.mxu0 0.0
          %2194 = vmatpush2.msra.mxu0 0.0
          %2195 = vmatprep.subr.mxu0 0.0
          %2196 = vmatpush2.msra.mxu0 0.0
          %2197 = vmatprep.subr.mxu0 0.0
          %2198 = vmatpush2.msra.mxu0 0.0
          %2199 = vmatprep.subr.mxu0 0.0
          %2200 = vmatpush2.msra.mxu0 0.0
          %2201 = vmatprep.subr.mxu0 0.0
          %2202 = vmatpush2.msra.mxu0 0.0
          %2203 = vmatprep.subr.mxu0 0.0
          %2204 = vmatpush2.msra.mxu0 0.0
          %2205 = vmatprep.subr.mxu0 0.0
          %2206 = vmatpush2.msra.mxu0 0.0
          %2207 = vmatprep.subr.mxu0 0.0
          %2208 = vmatpush2.msra.mxu0 0.0
          %2209 = vmatprep.subr.mxu0 0.0
          %2210 = vmatpush2.msra.mxu0 0.0
          %2211 = vmatprep.subr.mxu0 0.0
          %2212 = vmatpush2.msra.mxu0 0.0
          %2213 = vmatprep.subr.mxu0 0.0
          %2214 = vmatpush2.msra.mxu0 0.0
          %2215 = vmatprep.subr.mxu0 0.0
          %2216 = vmatpush2.msra.mxu0 0.0
          %2217 = vmatprep.subr.mxu0 0.0
          %2218 = vmatpush2.msra.mxu0 0.0
          %2219 = vmatprep.mubr.f32.mxu0 0.0
          %2220 = vmatmul.mubr.f32.gmra.mxu0 %v2153
          %v2221 = vpop.f32.mrf.mxu0
          %v2222 = vadd.f32 0.0, %v2221
          %v2223 = vpop.f32.mrf.mxu0
          %2224 = vdwg.mxu0
          %v2225 = vld [vmem:[%s4] sm:$0x3]
          %2227 = vset.pattern.permute.xlu0 0
          %2228 = vperm.xlu0 %2227, %v2225
          %v2229 = vpop.permute.xlu0 %2228
          %v2231 = vmul.f32 %v2222, %v2229
          %2232 = vst [vmem:[#allocation13] sm:$0x3] %v2231
        $region128: #{_lambda_.1} parent=103 // pred_fallthru
          _
        // Predicated region
        $region129: #{_lambda_.1} parent=103 // pred_check
          %p2233 = pneg %p557
        $region130: #{_lambda_.1} parent=103 // pred_check_branch
          %2235 = sbr.rel (%p2233) target = $region132
        $region131: #{_lambda_.1} parent=103 // pred_region
          %s2237 = ssub.s32 256, 256
          %2238 = vsyncadd [#allocation6], %s2237
          %s2239 = sshll.u32 [#allocation10], 4
          %s2240 = int_to_ptr.vmem [resolvable:$true] %s2239
          %2245 = dma.vmem_to_hbm [thread:$0]  %s2240, 256, %s21, [#allocation6], 128, 128, 8
        $region132: #{_lambda_.1} parent=103 // pred_fallthru
          _
        // Predicated region
        $region133: #{_lambda_.1} parent=103 // pred_check
          %p2246 = pneg %p578
        $region134: #{_lambda_.1} parent=103 // pred_check_branch
          %2248 = sbr.rel (%p2246) target = $region136
        $region135: #{_lambda_.1} parent=103 // pred_region
          %s2250 = ssub.s32 256, 256
          %2251 = vsyncadd [#allocation12], %s2250
          %s2252 = sshll.u32 [#allocation11], 4
          %s2253 = int_to_ptr.vmem [resolvable:$true] %s2252
          %2258 = dma.vmem_to_hbm [thread:$0]  %s2253, 256, %s22, [#allocation12], 128, 128, 8
        $region136: #{_lambda_.1} parent=103 // pred_fallthru
          _
        // Predicated region
        $region137: #{_lambda_.1} parent=103 // pred_check
          %p2259 = pneg %p599
        $region138: #{_lambda_.1} parent=103 // pred_check_branch
          %2261 = sbr.rel (%p2259) target = $region140
        $region139: #{_lambda_.1} parent=103 // pred_region
          %s2263 = ssub.s32 32, 32
          %2264 = vsyncadd [#allocation12], %s2263
          %s2266 = sshll.u32 [#allocation13], 4
          %s2267 = int_to_ptr.vmem [resolvable:$true] %s2266
          %2269 = dma.vmem_to_hbm [thread:$0]  %s2267, 32, %s23, [#allocation12]
        $region140: #{_lambda_.1} parent=103 // pred_fallthru
          _
        // Predicated region
        $region141: #{_lambda_.1} parent=103 // pred_check
          %p2270 = pneg %p557
        $region142: #{_lambda_.1} parent=103 // pred_check_branch
          %2272 = sbr.rel (%p2270) target = $region144
        $region143: #{_lambda_.1} parent=103 // pred_region
          %2273 = dma.done [#allocation6], 256
        $region144: #{_lambda_.1} parent=103 // pred_fallthru
          _
        // Predicated region
        $region145: #{_lambda_.1} parent=103 // pred_check
          %p2274 = pneg %p578
        $region146: #{_lambda_.1} parent=103 // pred_check_branch
          %2276 = sbr.rel (%p2274) target = $region148
        $region147: #{_lambda_.1} parent=103 // pred_region
          %2277 = dma.done [#allocation12], 256
        $region148: #{_lambda_.1} parent=103 // pred_fallthru
          _
        // Predicated region
        $region149: #{_lambda_.1} parent=103 // pred_check
          %p2278 = pneg %p599
        $region150: #{_lambda_.1} parent=103 // pred_check_branch
          %2280 = sbr.rel (%p2278) target = $region152
        $region151: #{_lambda_.1} parent=103 // pred_region
          %2281 = dma.done [#allocation12], 32
        $region152: #{_lambda_.1} parent=103 // pred_fallthru
          _
      $region104: #{_lambda_.1} parent=5 // pred_fallthru
        _
      %p2282 = scmp.le.s32.totalorder 2, %s38
      // Predicated region
      $region153: #{_lambda_.1} parent=5 // pred_check
        %p2283 = pneg %p2282
      $region154: #{_lambda_.1} parent=5 // pred_check_branch
        %2285 = sbr.rel (%p2283) target = $region156
      $region155: #{_lambda_.1} parent=5 // pred_region
        %s2286 = ssub.s32 %s38, 2
      $region156: #{_lambda_.1} parent=5 // pred_fallthru
        _
    $region6: #{_lambda_.1} parent=1 // loop_footer
      %s42 = sadd.s32 1, %s38
    $region7: #{_lambda_.1} parent=1 // loop_footer_branch
      %37 = sbr.rel target = $region3
    $region8: #{_lambda_.1} parent=1 // loop_exit
      _
    %2287 = vsyncpa [#allocation5], 1
    %s2288 = scalar_lea.sflag [#allocation5], 1
    %2289 = vsyncpa %s2288, 1
    %2290 = vsyncpa [#allocation8], 1
    %s2291 = scalar_lea.sflag [#allocation8], 1
    %2292 = vsyncpa %s2291, 1
    %2293 = vsyncpa [#allocation6], 1
    %s2294 = scalar_lea.sflag [#allocation6], 1
    %2295 = vsyncpa %s2294, 1
    %2296 = vsyncpa [#allocation12], 1

</llo_original>
